<compile_context>
chip_gen: v7x
topology: tpu7x:2x2x1
jax: 0.10.0
libtpu: 0.0.40
codegen_flags: <defaults>
</compile_context>

<pallas_src>
import functools

import jax
import jax.numpy as jnp
from jax.experimental import pallas as pl
from jax.experimental.pallas import tpu as pltpu


def _round_up(x, m):
    return ((x + m - 1) // m) * m


def _device_kind():
    try:
        return jax.devices()[0].device_kind.lower()
    except Exception:
        return ""


def _elementwise_dtype():
    """bf16 epilogue on chips with a bf16 VPU (v6e/v7x); f32 on v5e/older."""
    kind = _device_kind()
    if any(v in kind for v in ("v2", "v3", "v4", "v5")):
        return jnp.float32
    return jnp.bfloat16


def _choose_batch_tile(batch, tb_max=512):
    """Adaptive batch tile.

    batch <= 8  -> tile == batch (full-dim block, zero padding).
    batch >  8  -> multiple of 8, capped at tb_max, small enough that the
                   grid has >= 2 steps (keeps both v7x TensorCores busy and
                   amortizes per-step overhead with big tiles at large batch).
    """
    if batch <= 8:
        return batch
    half = _round_up((batch + 1) // 2, 8)
    return min(tb_max, half)


@functools.lru_cache(maxsize=None)
def _buffered_one_supported():
    """Probe once whether pl.BlockSpec(pipeline_mode=pl.Buffered(1)) works."""
    try:
        spec = pl.BlockSpec((8, 128), lambda i: (0, 0),
                            pipeline_mode=pl.Buffered(1))

        def _probe_kernel(x_ref, o_ref):
            o_ref[...] = x_ref[...] + 1.0

        fn = pl.pallas_call(
            _probe_kernel,
            out_shape=jax.ShapeDtypeStruct((8, 128), jnp.float32),
            grid=(2,),
            in_specs=[spec],
            out_specs=pl.BlockSpec((8, 128), lambda i: (0, 0)),
        )
        jax.block_until_ready(fn(jnp.zeros((8, 128), jnp.float32)))
        return True
    except Exception:
        return False


def _mlp_kernel(x_ref, w1_ref, wh_ref, w6_ref, b_ref, o_ref, *, ew_dtype):
    """One batch tile of the full 6-layer MLP. Weights stay VMEM-resident."""
    wdt = w1_ref.dtype                        # bf16
    hidden = wh_ref.shape[-1]
    na_pad = o_ref.shape[-1]

    b = b_ref[...]                            # (8, W) f32, loaded once
    x = x_ref[...].astype(wdt)                # f32 -> bf16 cast done in-kernel

    def bias_relu(acc_f32, row):
        bb = b[row:row + 1, :hidden].astype(ew_dtype)
        h = jnp.maximum(acc_f32.astype(ew_dtype) + bb, 0)
        return h.astype(wdt)                  # no-op when ew_dtype == bf16

    # Layer 1: (tb, 500) @ (500, hidden); Mosaic masks the unaligned K tail.
    h = bias_relu(jnp.dot(x, w1_ref[...], preferred_element_type=jnp.float32), 0)

    # Hidden layers 2..5 (stacked weights, static index -> fully unrolled).
    for layer in range(wh_ref.shape[0]):
        acc = jnp.dot(h, wh_ref[layer], preferred_element_type=jnp.float32)
        h = bias_relu(acc, layer + 1)

    # Final layer: f32 bias add, no activation; output lanes padded to 128.
    out = jnp.dot(h, w6_ref[...], preferred_element_type=jnp.float32)
    o_ref[...] = (out + b[5:6, :na_pad]).astype(o_ref.dtype)


def prepare_params(params, weight_dtype=jnp.bfloat16, lane=128):
    """Pack / pad the 6 (W, b) pairs once (amortized across forward calls).

    params: list of 6 (W, b); W is (in, out), b is (out,).
    Returns (w1q, wh, w6p, bias_table).
    """
    (w1, b1), (w2, b2), (w3, b3), (w4, b4), (w5, b5), (w6, b6) = params
    in_features, hidden = w1.shape
    num_actions = w6.shape[1]

    w1q = w1.astype(weight_dtype)                              # (500, 256), K unpadded
    wh = jnp.stack([w2, w3, w4, w5]).astype(weight_dtype)      # (4, 256, 256)

    # Final weight: pad output lanes (4 -> 128) with zero columns.
    na_pad = _round_up(max(num_actions, lane), lane)
    w6p = jnp.zeros((hidden, na_pad), weight_dtype)
    w6p = w6p.at[:, :num_actions].set(w6.astype(weight_dtype))

    # All biases in one f32 table, padded to 8 rows (sublane-aligned).
    width = max(hidden, na_pad)
    bias = jnp.zeros((8, width), jnp.float32)
    for i, bb in enumerate((b1, b2, b3, b4, b5)):
        bias = bias.at[i, :hidden].set(bb.reshape(-1).astype(jnp.float32))
    bias = bias.at[5, :num_actions].set(b6.reshape(-1).astype(jnp.float32))

    return w1q, wh, w6p, bias


@functools.partial(
    jax.jit,
    static_argnames=("num_actions", "tb_max", "ew_dtype", "use_buffered"))
def _forward_impl(x, w1q, wh, w6p, bias, *, num_actions, tb_max, ew_dtype,
                  use_buffered):
    batch, in_features = x.shape
    hidden = w1q.shape[1]
    na_pad = w6p.shape[1]

    tb = _choose_batch_tile(batch, tb_max)
    bpad = _round_up(batch, tb)
    x_in = x if bpad == batch else jnp.pad(x, ((0, bpad - batch), (0, 0)))
    grid = (bpad // tb,)

    resident = {"pipeline_mode": pl.Buffered(1)} if use_buffered else {}

    cost = pl.CostEstimate(
        flops=int(2 * bpad * (in_features * hidden
                              + wh.shape[0] * hidden * hidden
                              + hidden * na_pad)),
        transcendentals=0,
        bytes_accessed=int(x_in.size * x_in.dtype.itemsize
                           + w1q.size * w1q.dtype.itemsize
                           + wh.size * wh.dtype.itemsize
                           + w6p.size * w6p.dtype.itemsize
                           + bias.size * bias.dtype.itemsize
                           + bpad * na_pad * 4),
    )

    out_padded = pl.pallas_call(
        functools.partial(_mlp_kernel, ew_dtype=ew_dtype),
        out_shape=jax.ShapeDtypeStruct((bpad, na_pad), jnp.float32),
        grid_spec=pltpu.PrefetchScalarGridSpec(
            num_scalar_prefetch=0,
            grid=grid,
            in_specs=[
                pl.BlockSpec((tb, in_features), lambda i: (i, 0)),        # x tile
                pl.BlockSpec(w1q.shape, lambda i: (0, 0), **resident),    # resident
                pl.BlockSpec(wh.shape, lambda i: (0, 0, 0), **resident),  # resident
                pl.BlockSpec(w6p.shape, lambda i: (0, 0), **resident),    # resident
                pl.BlockSpec(bias.shape, lambda i: (0, 0), **resident),   # resident
            ],
            out_specs=pl.BlockSpec((tb, na_pad), lambda i: (i, 0)),
        ),
        compiler_params=pltpu.CompilerParams(
            dimension_semantics=("parallel",)),
        cost_estimate=cost,
    )(x_in, w1q, wh, w6p, bias)

    return out_padded[:batch, :num_actions]


def poker_network_forward(x, packed, *, num_actions, tb_max=512):
    """Forward pass. x: (batch, input_size) f32 -> (batch, num_actions) f32."""
    return _forward_impl(
        x, *packed,
        num_actions=num_actions, tb_max=tb_max,
        ew_dtype=_elementwise_dtype(),
        use_buffered=_buffered_one_supported())


def init_params(key, input_size=500, hidden_size=256, num_actions=4):
    """PyTorch nn.Linear-style init: U(-1/sqrt(fan_in), 1/sqrt(fan_in))."""
    sizes = [(input_size, hidden_size)] + [(hidden_size, hidden_size)] * 4 + \
            [(hidden_size, num_actions)]
    params = []
    for fan_in, fan_out in sizes:
        key, kw, kb = jax.random.split(key, 3)
        bound = 1.0 / float(fan_in) ** 0.5
        w = jax.random.uniform(kw, (fan_in, fan_out), jnp.float32, -bound, bound)
        b = jax.random.uniform(kb, (fan_out,), jnp.float32, -bound, bound)
        params.append((w, b))
    return params


def reference_forward_f32(x, params):
    """Pure-f32 reference of the PyTorch forward."""
    h = x
    for i, (w, b) in enumerate(params):
        h = jnp.dot(h, w, precision=jax.lax.Precision.HIGHEST) + b.reshape(1, -1)
        if i < len(params) - 1:
            h = jnp.maximum(h, 0.0)
    return h


def reference_forward_matched(x, params, ew_dtype, weight_dtype=jnp.bfloat16):
    """Reference mirroring the kernel's precision (bf16 matmul inputs, f32
    accumulation, ew_dtype bias-add/ReLU on hidden layers, f32 final layer)."""
    h = x.astype(jnp.float32)
    n = len(params)
    for i, (w, b) in enumerate(params):
        hq = h.astype(weight_dtype).astype(jnp.float32)
        wq = w.astype(weight_dtype).astype(jnp.float32)
        acc = jnp.dot(hq, wq, precision=jax.lax.Precision.HIGHEST)
        if i < n - 1:
            hb = acc.astype(ew_dtype) + b.reshape(1, -1).astype(ew_dtype)
            h = jnp.maximum(hb, 0).astype(jnp.float32)
        else:
            h = acc + b.reshape(1, -1).astype(jnp.float32)
    return h


if __name__ == "__main__":
    key = jax.random.PRNGKey(0)
    k_params, k_x = jax.random.split(key)

    input_size, hidden_size, num_actions = 500, 256, 4
    batch = 2

    params = init_params(k_params, input_size, hidden_size, num_actions)
    x = jax.random.normal(k_x, (batch, input_size), jnp.float32)

    packed = prepare_params(params)           # packing / padding done once

    out = poker_network_forward(x, packed, num_actions=num_actions)
    out = jax.block_until_ready(out)
    assert out.shape == (batch, num_actions), out.shape

    ew_dtype = _elementwise_dtype()
    ref_matched = reference_forward_matched(x, params, ew_dtype)   # kernel precision
    ref_f32 = reference_forward_f32(x, params)                     # module semantics

    err_m = float(jnp.max(jnp.abs(out - ref_matched)))
    err_f = float(jnp.max(jnp.abs(out - ref_f32)))
    assert jnp.allclose(out, ref_matched, atol=1e-2, rtol=1e-2), f"matched err={err_m}"
    assert jnp.allclose(out, ref_f32, atol=5e-2, rtol=5e-2), f"f32 err={err_f}"

    print("KERNEL_OK")
</pallas_src>

<mosaic_0001>
module attributes {stable_mosaic.version = 11 : i64} {
  func.func @_probe_kernel(%arg0: i32, %arg1: memref<8x128xf32, #tpu.memory_space<vmem>>, %arg2: memref<8x128xf32, #tpu.memory_space<vmem>>) attributes {dimension_semantics = [#tpu.dimension_semantics<arbitrary>], iteration_bounds = array<i64: 2>, scalar_prefetch = 0 : i64, scratch_operands = 0 : i64, tpu.core_type = #tpu.core_type<tc>, window_params = [{pipeline_mode = #tpu.pipeline_mode<synchronous>, transform_indices = @transform_0, window_bounds = array<i64: 8, 128>}, {pipeline_mode = #tpu.pipeline_mode<synchronous>, transform_indices = @transform_1, window_bounds = array<i64: 8, 128>}]} {
    %c0 = arith.constant 0 : index
    %c0_0 = arith.constant 0 : index
    %0 = vector.load %arg1[%c0, %c0_0] : memref<8x128xf32, #tpu.memory_space<vmem>>, vector<8x128xf32>
    %cst = arith.constant 1.000000e+00 : f32
    %1 = vector.broadcast %cst : f32 to vector<8x128xf32>
    %2 = arith.addf %0, %1 : vector<8x128xf32>
    %c0_1 = arith.constant 0 : index
    %c0_2 = arith.constant 0 : index
    %3 = vector.load %arg2[%c0_1, %c0_2] : memref<8x128xf32, #tpu.memory_space<vmem>>, vector<8x128xf32>
    tpu.vector_store %arg2[%c0_1, %c0_2], %2 {strides = array<i32>} : memref<8x128xf32, #tpu.memory_space<vmem>>, vector<8x128xf32>,
    return
  }
  func.func @transform_0(%arg0: i32) -> (i32, i32) {
    %c0_i32 = arith.constant 0 : i32
    %c0_i32_0 = arith.constant 0 : i32
    %c0_i32_1 = arith.constant 0 : i32
    return %c0_i32, %c0_i32_0 : i32, i32
  }
  func.func @transform_1(%arg0: i32) -> (i32, i32) {
    %c0_i32 = arith.constant 0 : i32
    %c0_i32_0 = arith.constant 0 : i32
    %c0_i32_1 = arith.constant 0 : i32
    return %c0_i32, %c0_i32_0 : i32, i32
  }
}

module attributes {stable_mosaic.version = 11 : i64} {
  func.func @_mlp_kernel(%arg0: i32, %arg1: memref<2x500xf32, #tpu.memory_space<vmem>>, %arg2: memref<500x256xbf16, #tpu.memory_space<vmem>>, %arg3: memref<4x256x256xbf16, #tpu.memory_space<vmem>>, %arg4: memref<256x128xbf16, #tpu.memory_space<vmem>>, %arg5: memref<8x256xf32, #tpu.memory_space<vmem>>, %arg6: memref<2x128xf32, #tpu.memory_space<vmem>>) attributes {dimension_semantics = [#tpu.dimension_semantics<parallel>], iteration_bounds = array<i64: 1>, scalar_prefetch = 0 : i64, scratch_operands = 0 : i64, tpu.core_type = #tpu.core_type<tc>, window_params = [{transform_indices = @transform_0, window_bounds = array<i64: 2, 500>}, {pipeline_mode = #tpu.pipeline_mode<synchronous>, transform_indices = @transform_1, window_bounds = array<i64: 500, 256>}, {pipeline_mode = #tpu.pipeline_mode<synchronous>, transform_indices = @transform_2, window_bounds = array<i64: 4, 256, 256>}, {pipeline_mode = #tpu.pipeline_mode<synchronous>, transform_indices = @transform_3, window_bounds = array<i64: 256, 128>}, {pipeline_mode = #tpu.pipeline_mode<synchronous>, transform_indices = @transform_4, window_bounds = array<i64: 8, 256>}, {transform_indices = @transform_5, window_bounds = array<i64: 2, 128>}]} {
    %c0 = arith.constant 0 : index
    %c0_0 = arith.constant 0 : index
    %0 = vector.load %arg5[%c0, %c0_0] : memref<8x256xf32, #tpu.memory_space<vmem>>, vector<8x256xf32>
    %c0_1 = arith.constant 0 : index
    %c0_2 = arith.constant 0 : index
    %1 = vector.load %arg1[%c0_1, %c0_2] : memref<2x500xf32, #tpu.memory_space<vmem>>, vector<2x500xf32>
    %2 = arith.truncf %1 : vector<2x500xf32> to vector<2x500xbf16>
    %c0_3 = arith.constant 0 : index
    %c0_4 = arith.constant 0 : index
    %3 = vector.load %arg2[%c0_3, %c0_4] : memref<500x256xbf16, #tpu.memory_space<vmem>>, vector<500x256xbf16>
    %cst = arith.constant dense<0.000000e+00> : vector<2x256xf32>
    %4 = tpu.matmul %2, %3, %cst {dimension_numbers = #tpu.dot_dimension_numbers<[1], [0], [0], [1], [0, 0, 1, 1], [], []>} : vector<2x500xbf16>, vector<500x256xbf16>, vector<2x256xf32> -> vector<2x256xf32>
    %5 = vector.extract_strided_slice %0 {offsets = [0, 0], sizes = [1, 256], strides = [1, 1]} : vector<8x256xf32> to vector<1x256xf32>
    %6 = arith.truncf %5 : vector<1x256xf32> to vector<1x256xbf16>
    %7 = arith.truncf %4 : vector<2x256xf32> to vector<2x256xbf16>
    %8 = vector.broadcast %6 : vector<1x256xbf16> to vector<2x256xbf16>
    %9 = arith.addf %7, %8 : vector<2x256xbf16>
    %cst_5 = arith.constant 0.000000e+00 : bf16
    %10 = vector.broadcast %cst_5 : bf16 to vector<2x256xbf16>
    %11 = arith.maximumf %9, %10 : vector<2x256xbf16>
    %c0_6 = arith.constant 0 : index
    %c0_7 = arith.constant 0 : index
    %c0_8 = arith.constant 0 : index
    %12 = vector.load %arg3[%c0_6, %c0_7, %c0_8] : memref<4x256x256xbf16, #tpu.memory_space<vmem>>, vector<1x256x256xbf16>
    %13 = vector.shape_cast %12 : vector<1x256x256xbf16> to vector<256x256xbf16>
    %cst_9 = arith.constant dense<0.000000e+00> : vector<2x256xf32>
    %14 = tpu.matmul %11, %13, %cst_9 {dimension_numbers = #tpu.dot_dimension_numbers<[1], [0], [0], [1], [0, 0, 1, 1], [], []>} : vector<2x256xbf16>, vector<256x256xbf16>, vector<2x256xf32> -> vector<2x256xf32>
    %15 = vector.extract_strided_slice %0 {offsets = [1, 0], sizes = [1, 256], strides = [1, 1]} : vector<8x256xf32> to vector<1x256xf32>
    %16 = arith.truncf %15 : vector<1x256xf32> to vector<1x256xbf16>
    %17 = arith.truncf %14 : vector<2x256xf32> to vector<2x256xbf16>
    %18 = vector.broadcast %16 : vector<1x256xbf16> to vector<2x256xbf16>
    %19 = arith.addf %17, %18 : vector<2x256xbf16>
    %cst_10 = arith.constant 0.000000e+00 : bf16
    %20 = vector.broadcast %cst_10 : bf16 to vector<2x256xbf16>
    %21 = arith.maximumf %19, %20 : vector<2x256xbf16>
    %c1 = arith.constant 1 : index
    %c0_11 = arith.constant 0 : index
    %c0_12 = arith.constant 0 : index
    %22 = vector.load %arg3[%c1, %c0_11, %c0_12] : memref<4x256x256xbf16, #tpu.memory_space<vmem>>, vector<1x256x256xbf16>
    %23 = vector.shape_cast %22 : vector<1x256x256xbf16> to vector<256x256xbf16>
    %cst_13 = arith.constant dense<0.000000e+00> : vector<2x256xf32>
    %24 = tpu.matmul %21, %23, %cst_13 {dimension_numbers = #tpu.dot_dimension_numbers<[1], [0], [0], [1], [0, 0, 1, 1], [], []>} : vector<2x256xbf16>, vector<256x256xbf16>, vector<2x256xf32> -> vector<2x256xf32>
    %25 = vector.extract_strided_slice %0 {offsets = [2, 0], sizes = [1, 256], strides = [1, 1]} : vector<8x256xf32> to vector<1x256xf32>
    %26 = arith.truncf %25 : vector<1x256xf32> to vector<1x256xbf16>
    %27 = arith.truncf %24 : vector<2x256xf32> to vector<2x256xbf16>
    %28 = vector.broadcast %26 : vector<1x256xbf16> to vector<2x256xbf16>
    %29 = arith.addf %27, %28 : vector<2x256xbf16>
    %cst_14 = arith.constant 0.000000e+00 : bf16
    %30 = vector.broadcast %cst_14 : bf16 to vector<2x256xbf16>
    %31 = arith.maximumf %29, %30 : vector<2x256xbf16>
    %c2 = arith.constant 2 : index
    %c0_15 = arith.constant 0 : index
    %c0_16 = arith.constant 0 : index
    %32 = vector.load %arg3[%c2, %c0_15, %c0_16] : memref<4x256x256xbf16, #tpu.memory_space<vmem>>, vector<1x256x256xbf16>
    %33 = vector.shape_cast %32 : vector<1x256x256xbf16> to vector<256x256xbf16>
    %cst_17 = arith.constant dense<0.000000e+00> : vector<2x256xf32>
    %34 = tpu.matmul %31, %33, %cst_17 {dimension_numbers = #tpu.dot_dimension_numbers<[1], [0], [0], [1], [0, 0, 1, 1], [], []>} : vector<2x256xbf16>, vector<256x256xbf16>, vector<2x256xf32> -> vector<2x256xf32>
    %35 = vector.extract_strided_slice %0 {offsets = [3, 0], sizes = [1, 256], strides = [1, 1]} : vector<8x256xf32> to vector<1x256xf32>
    %36 = arith.truncf %35 : vector<1x256xf32> to vector<1x256xbf16>
    %37 = arith.truncf %34 : vector<2x256xf32> to vector<2x256xbf16>
    %38 = vector.broadcast %36 : vector<1x256xbf16> to vector<2x256xbf16>
    %39 = arith.addf %37, %38 : vector<2x256xbf16>
    %cst_18 = arith.constant 0.000000e+00 : bf16
    %40 = vector.broadcast %cst_18 : bf16 to vector<2x256xbf16>
    %41 = arith.maximumf %39, %40 : vector<2x256xbf16>
    %c3 = arith.constant 3 : index
    %c0_19 = arith.constant 0 : index
    %c0_20 = arith.constant 0 : index
    %42 = vector.load %arg3[%c3, %c0_19, %c0_20] : memref<4x256x256xbf16, #tpu.memory_space<vmem>>, vector<1x256x256xbf16>
    %43 = vector.shape_cast %42 : vector<1x256x256xbf16> to vector<256x256xbf16>
    %cst_21 = arith.constant dense<0.000000e+00> : vector<2x256xf32>
    %44 = tpu.matmul %41, %43, %cst_21 {dimension_numbers = #tpu.dot_dimension_numbers<[1], [0], [0], [1], [0, 0, 1, 1], [], []>} : vector<2x256xbf16>, vector<256x256xbf16>, vector<2x256xf32> -> vector<2x256xf32>
    %45 = vector.extract_strided_slice %0 {offsets = [4, 0], sizes = [1, 256], strides = [1, 1]} : vector<8x256xf32> to vector<1x256xf32>
    %46 = arith.truncf %45 : vector<1x256xf32> to vector<1x256xbf16>
    %47 = arith.truncf %44 : vector<2x256xf32> to vector<2x256xbf16>
    %48 = vector.broadcast %46 : vector<1x256xbf16> to vector<2x256xbf16>
    %49 = arith.addf %47, %48 : vector<2x256xbf16>
    %cst_22 = arith.constant 0.000000e+00 : bf16
    %50 = vector.broadcast %cst_22 : bf16 to vector<2x256xbf16>
    %51 = arith.maximumf %49, %50 : vector<2x256xbf16>
    %c0_23 = arith.constant 0 : index
    %c0_24 = arith.constant 0 : index
    %52 = vector.load %arg4[%c0_23, %c0_24] : memref<256x128xbf16, #tpu.memory_space<vmem>>, vector<256x128xbf16>
    %cst_25 = arith.constant dense<0.000000e+00> : vector<2x128xf32>
    %53 = tpu.matmul %51, %52, %cst_25 {dimension_numbers = #tpu.dot_dimension_numbers<[1], [0], [0], [1], [0, 0, 1, 1], [], []>} : vector<2x256xbf16>, vector<256x128xbf16>, vector<2x128xf32> -> vector<2x128xf32>
    %54 = vector.extract_strided_slice %0 {offsets = [5, 0], sizes = [1, 128], strides = [1, 1]} : vector<8x256xf32> to vector<1x128xf32>
    %55 = vector.broadcast %54 : vector<1x128xf32> to vector<2x128xf32>
    %56 = arith.addf %53, %55 : vector<2x128xf32>
    %c0_26 = arith.constant 0 : index
    %c0_27 = arith.constant 0 : index
    %57 = vector.load %arg6[%c0_26, %c0_27] : memref<2x128xf32, #tpu.memory_space<vmem>>, vector<2x128xf32>
    tpu.vector_store %arg6[%c0_26, %c0_27], %56 {strides = array<i32>} : memref<2x128xf32, #tpu.memory_space<vmem>>, vector<2x128xf32>,
    return
  }
  func.func @transform_0(%arg0: i32) -> (i32, i32) {
    %c0_i32 = arith.constant 0 : i32
    %c0_i32_0 = arith.constant 0 : i32
    return %arg0, %c0_i32 : i32, i32
  }
  func.func @transform_1(%arg0: i32) -> (i32, i32) {
    %c0_i32 = arith.constant 0 : i32
    %c0_i32_0 = arith.constant 0 : i32
    %c0_i32_1 = arith.constant 0 : i32
    return %c0_i32, %c0_i32_0 : i32, i32
  }
  func.func @transform_2(%arg0: i32) -> (i32, i32, i32) {
    %c0_i32 = arith.constant 0 : i32
    %c0_i32_0 = arith.constant 0 : i32
    %c0_i32_1 = arith.constant 0 : i32
    %c0_i32_2 = arith.constant 0 : i32
    return %c0_i32, %c0_i32_0, %c0_i32_1 : i32, i32, i32
  }
  func.func @transform_3(%arg0: i32) -> (i32, i32) {
    %c0_i32 = arith.constant 0 : i32
    %c0_i32_0 = arith.constant 0 : i32
    %c0_i32_1 = arith.constant 0 : i32
    return %c0_i32, %c0_i32_0 : i32, i32
  }
  func.func @transform_4(%arg0: i32) -> (i32, i32) {
    %c0_i32 = arith.constant 0 : i32
    %c0_i32_0 = arith.constant 0 : i32
    %c0_i32_1 = arith.constant 0 : i32
    return %c0_i32, %c0_i32_0 : i32, i32
  }
  func.func @transform_5(%arg0: i32) -> (i32, i32) {
    %c0_i32 = arith.constant 0 : i32
    %c0_i32_0 = arith.constant 0 : i32
    return %arg0, %c0_i32 : i32, i32
  }
}

</mosaic_0001>

<llo_original>
// kernel: tpu_custom_call.1
$region0: #{tpu_custom_call.1}
  #allocation0 [shape = 'u32[]', space=smem, size = 0x4, offset = 0x4, fixed_abs, tag = 'smem constant byte address 0x4 - core index']
  #allocation1 [shape = 'u32[144,128]{1,0:T(1,128)}', space=vmem, size = 0x12000, scoped, tag = 'internal scratch']
  %s0 = inlined_call_operand.hbm [shape: f32[8,128], index: 0, kind: input, shape index: {}]
  %s1 = inlined_call_operand.hbm [shape: f32[8,128], index: 1, kind: output, shape index: {}]
  %s2 = sld [smem:[#allocation0]]
  $region41: #{tpu_custom_call.1} parent=0
    _
  %s4 = ssub.s32 1, %s2
  %s5 = scalar_select 0, %s4, %s2
  $region1: #{tpu_custom_call.1} parent=0
    #allocation2 [shape = 'u8[4096]{0}', space=vmem, size = 0x1000, scoped, tag = 'input window, operand 0, single buffered']
    #allocation3 [shape = 's32[2]{0}', space=sflag, size = 0x8, scoped, tag = 'scoped memory for tpu_custom_call.1']
    #allocation4 [shape = 's32[2]{0}', space=sflag, size = 0x8, scoped, tag = 'scoped memory for tpu_custom_call.1']
    #allocation5 [shape = 'u8[4096]{0}', space=vmem, size = 0x1000, scoped, tag = 'output window, operand 0, single buffered']
    %6 = vsyncpa [#allocation3], 0
    %7 = vsyncpa [#allocation4], 0
    loop: start=0, step=1, limit=4
    $region2: #{tpu_custom_call.1} parent=1 // loop_pre_header
      _
    $region3: #{tpu_custom_call.1} parent=1 // loop_header
      %s9 = sphi 0, %s13
      %p10 = scmp.ge.s32.totalorder %s9, 4
      %s17 = sphi 0, %s17
      %s19 = sphi 0, %s17
      %s20 = sphi 0, %s19
      %s34 = sphi 0, %s20
      %s38 = sphi 0, %s38
      %s40 = sphi 0, %s38
      %s41 = sphi 0, %s40
      %s55 = sphi 0, %s41
    $region4: #{tpu_custom_call.1} parent=1 // loop_header_branch
      %12 = sbr.rel (%p10) target = $region8
    $region5: #{tpu_custom_call.1} parent=1 // loop_body
      %s14 = ssub.s32 %s9, 1
      %s15 = ssub.s32 %s9, 2
      %s16 = sadd.s32 %s9, 1
      %s18 = sadd.s32 %s17, 1
      %p21 = scmp.eq.s32.totalorder %s9, 1
      %p22 = scmp.ne.s32.totalorder %s17, %s19
      %p23 = scmp.eq.s32.totalorder %s9, 0
      %p24 = por %p22, %p23
      %p25 = scmp.ne.s32.totalorder %s17, %s19
      %p26 = scmp.eq.s32.totalorder %s14, 1
      %p27 = por %p25, %p26
      %p28 = scmp.ne.s32.totalorder %s19, %s20
      %p29 = scmp.eq.s32.totalorder %s14, 0
      %p30 = por %p28, %p29
      %p31 = scmp.ne.s32.totalorder %s19, %s20
      %p32 = scmp.eq.s32.totalorder %s15, 1
      %p33 = por %p31, %p32
      %p35 = scmp.ne.s32.totalorder %s20, %s34
      %p36 = scmp.eq.s32.totalorder %s15, 0
      %p37 = por %p35, %p36
      %s39 = sadd.s32 %s38, 1
      %p42 = scmp.eq.s32.totalorder %s9, 1
      %p43 = scmp.ne.s32.totalorder %s38, %s40
      %p44 = scmp.eq.s32.totalorder %s9, 0
      %p45 = por %p43, %p44
      %p46 = scmp.ne.s32.totalorder %s38, %s40
      %p47 = scmp.eq.s32.totalorder %s14, 1
      %p48 = por %p46, %p47
      %p49 = scmp.ne.s32.totalorder %s40, %s41
      %p50 = scmp.eq.s32.totalorder %s14, 0
      %p51 = por %p49, %p50
      %p52 = scmp.ne.s32.totalorder %s40, %s41
      %p53 = scmp.eq.s32.totalorder %s15, 1
      %p54 = por %p52, %p53
      %p56 = scmp.ne.s32.totalorder %s41, %s55
      %p57 = scmp.eq.s32.totalorder %s15, 0
      %p58 = por %p56, %p57
      %p59 = scmp.le.s32.totalorder 1, %s9
      %p60 = scmp.lt.s32.totalorder %s9, 3
      %p61 = pnand %p59, %p60
      %p62 = pneg %p61
      // Predicated region
      $region9: #{tpu_custom_call.1} parent=5 // pred_check
        _
      $region10: #{tpu_custom_call.1} parent=5 // pred_check_branch
        %64 = sbr.rel (%p61) target = $region12
      $region11: #{tpu_custom_call.1} parent=5 // pred_region
        %s65 = ssub.s32 %s9, 1
        // Predicated region
        $region13: #{tpu_custom_call.1} parent=11 // pred_check
          %p66 = pneg %p30
        $region14: #{tpu_custom_call.1} parent=11 // pred_check_branch
          %68 = sbr.rel (%p66) target = $region16
        $region15: #{tpu_custom_call.1} parent=11 // pred_region
          %s70 = ssub.s32 128, 128
          %71 = vsyncadd [#allocation3], %s70
          %s73 = sshll.u32 [#allocation2], 4
          %s74 = int_to_ptr.vmem [resolvable:$true] %s73
          %76 = dma.hbm_to_vmem [thread:$0]  %s0, 128, %s74, [#allocation3]
        $region16: #{tpu_custom_call.1} parent=11 // pred_fallthru
          _
      $region12: #{tpu_custom_call.1} parent=5 // pred_fallthru
        _
      %p77 = scmp.lt.s32.totalorder %s9, 2
      // Predicated region
      $region17: #{tpu_custom_call.1} parent=5 // pred_check
        %p78 = pneg %p77
      $region18: #{tpu_custom_call.1} parent=5 // pred_check_branch
        %80 = sbr.rel (%p78) target = $region20
      $region19: #{tpu_custom_call.1} parent=5 // pred_region
        _
      $region20: #{tpu_custom_call.1} parent=5 // pred_fallthru
        _
      %p81 = scmp.le.s32.totalorder 1, %s9
      %p82 = scmp.lt.s32.totalorder %s9, 3
      %p83 = pnand %p81, %p82
      %p84 = pneg %p83
      // Predicated region
      $region21: #{tpu_custom_call.1} parent=5 // pred_check
        _
      $region22: #{tpu_custom_call.1} parent=5 // pred_check_branch
        %86 = sbr.rel (%p83) target = $region24
      $region23: #{tpu_custom_call.1} parent=5 // pred_region
        %s87 = ssub.s32 %s9, 1
        // Predicated region
        $region25: #{tpu_custom_call.1} parent=23 // pred_check
          %p88 = pneg %p30
        $region26: #{tpu_custom_call.1} parent=23 // pred_check_branch
          %90 = sbr.rel (%p88) target = $region28
        $region27: #{tpu_custom_call.1} parent=23 // pred_region
          %91 = dma.done [#allocation3], 128
        $region28: #{tpu_custom_call.1} parent=23 // pred_fallthru
          _
        %p92 = pneg %p30
        %p93 = pneg %p27
        %p94 = pneg %p51
        %p95 = pneg %p48
        %v96 = vld [vmem:[#allocation2] sm:$0xff]
        %v97 = vadd.f32 %v96, 1.0
        %98 = vst [vmem:[#allocation5] sm:$0xff] %v97
        // Predicated region
        $region29: #{tpu_custom_call.1} parent=23 // pred_check
          %p99 = pneg %p48
        $region30: #{tpu_custom_call.1} parent=23 // pred_check_branch
          %101 = sbr.rel (%p99) target = $region32
        $region31: #{tpu_custom_call.1} parent=23 // pred_region
          %s103 = ssub.s32 128, 128
          %104 = vsyncadd [#allocation4], %s103
          %s106 = sshll.u32 [#allocation5], 4
          %s107 = int_to_ptr.vmem [resolvable:$true] %s106
          %109 = dma.vmem_to_hbm [thread:$0]  %s107, 128, %s1, [#allocation4]
        $region32: #{tpu_custom_call.1} parent=23 // pred_fallthru
          _
        // Predicated region
        $region33: #{tpu_custom_call.1} parent=23 // pred_check
          %p110 = pneg %p48
        $region34: #{tpu_custom_call.1} parent=23 // pred_check_branch
          %112 = sbr.rel (%p110) target = $region36
        $region35: #{tpu_custom_call.1} parent=23 // pred_region
          %113 = dma.done [#allocation4], 128
        $region36: #{tpu_custom_call.1} parent=23 // pred_fallthru
          _
      $region24: #{tpu_custom_call.1} parent=5 // pred_fallthru
        _
      %p114 = scmp.le.s32.totalorder 2, %s9
      // Predicated region
      $region37: #{tpu_custom_call.1} parent=5 // pred_check
        %p115 = pneg %p114
      $region38: #{tpu_custom_call.1} parent=5 // pred_check_branch
        %117 = sbr.rel (%p115) target = $region40
      $region39: #{tpu_custom_call.1} parent=5 // pred_region
        %s118 = ssub.s32 %s9, 2
      $region40: #{tpu_custom_call.1} parent=5 // pred_fallthru
        _
    $region6: #{tpu_custom_call.1} parent=1 // loop_footer
      %s13 = sadd.s32 1, %s9
    $region7: #{tpu_custom_call.1} parent=1 // loop_footer_branch
      %8 = sbr.rel target = $region3
    $region8: #{tpu_custom_call.1} parent=1 // loop_exit
      _
    %119 = vsyncpa [#allocation3], 1
    %s120 = scalar_lea.sflag [#allocation3], 1
    %121 = vsyncpa %s120, 1
    %122 = vsyncpa [#allocation4], 1
    %s123 = scalar_lea.sflag [#allocation4], 1
    %124 = vsyncpa %s123, 1

// kernel: _forward_impl.1
$region0: #{_forward_impl.1}
  #allocation0 [shape = 'u32[]', space=smem, size = 0x4, offset = 0x4, fixed_abs, tag = 'smem constant byte address 0x4 - core index']
  #allocation1 [shape = 'u32[144,128]{1,0:T(1,128)}', space=vmem, size = 0x12000, scoped, tag = 'internal scratch']
  %s0 = inlined_call_operand.hbm [shape: f32[2,500], index: 0, kind: input, shape index: {}]
  %s1 = inlined_call_operand.hbm [shape: bf16[500,256], index: 1, kind: input, shape index: {}]
  %s2 = inlined_call_operand.hbm [shape: bf16[4,256,256], index: 2, kind: input, shape index: {}]
  %s3 = inlined_call_operand.hbm [shape: bf16[256,128], index: 3, kind: input, shape index: {}]
  %s4 = inlined_call_operand.hbm [shape: f32[8,256], index: 4, kind: input, shape index: {}]
  %s5 = inlined_call_operand.hbm [shape: f32[2,128], index: 5, kind: output, shape index: {}]
  %s6 = sld [smem:[#allocation0]]
  $region50: #{_forward_impl.1} parent=0
    _
  %s8 = ssub.s32 1, %s6
  %s9 = scalar_select 0, %s8, %s6
  $region1: #{_forward_impl.1} parent=0
    #allocation2 [shape = 'u8[4096]{0}', space=vmem, size = 0x1000, scoped, tag = 'input window, operand 0, single buffered']
    #allocation3 [shape = 's32[1]{0}', space=sflag, size = 0x4, scoped, tag = 'scoped memory for _forward_impl.1']
    #allocation4 [shape = 's32[1]{0}', space=sflag, size = 0x4, scoped, tag = 'scoped memory for _forward_impl.1']
    #allocation5 [shape = 'u8[258048]{0}', space=vmem, size = 0x3f000, scoped, tag = 'input window, operand 1, single buffered']
    #allocation6 [shape = 's32[1]{0}', space=sflag, size = 0x4, scoped, tag = 'scoped memory for _forward_impl.1']
    #allocation7 [shape = 'u8[524288]{0}', space=vmem, size = 0x80000, scoped, tag = 'input window, operand 2, single buffered']
    #allocation8 [shape = 'u8[65536]{0}', space=vmem, size = 0x10000, scoped, tag = 'input window, operand 3, single buffered']
    #allocation9 [shape = 's32[1]{0}', space=sflag, size = 0x4, scoped, tag = 'scoped memory for _forward_impl.1']
    #allocation10 [shape = 'u8[8192]{0}', space=vmem, size = 0x2000, scoped, tag = 'input window, operand 4, single buffered']
    #allocation11 [shape = 'u8[1024]{0}', space=vmem, size = 0x400, scoped, tag = 'output window, operand 0, single buffered']
    %10 = vsyncpa [#allocation3], 0
    %11 = vsyncpa [#allocation6], 0
    %12 = vsyncpa [#allocation9], 0
    %13 = vsyncpa [#allocation4], 0
    // Predicated region
    $region2: #{_forward_impl.1} parent=1 // pred_check
      _
    $region3: #{_forward_impl.1} parent=1 // pred_check_branch
      %15 = sbr.rel (0) target = $region5
    $region4: #{_forward_impl.1} parent=1 // pred_region
      %s17 = ssub.s32 128, 128
      %18 = vsyncadd [#allocation3], %s17
      %s20 = sshll.u32 [#allocation2], 4
      %s21 = int_to_ptr.vmem [resolvable:$true] %s20
      %23 = dma.hbm_to_vmem [thread:$0]  %s0, 128, %s21, [#allocation3]
    $region5: #{_forward_impl.1} parent=1 // pred_fallthru
      _
    // Predicated region
    $region6: #{_forward_impl.1} parent=1 // pred_check
      _
    $region7: #{_forward_impl.1} parent=1 // pred_check_branch
      %25 = sbr.rel (0) target = $region9
    $region8: #{_forward_impl.1} parent=1 // pred_region
      %s27 = ssub.s32 8064, 8064
      %28 = vsyncadd [#allocation6], %s27
      %s29 = sshll.u32 [#allocation5], 4
      %s30 = int_to_ptr.vmem [resolvable:$true] %s29
      %35 = dma.hbm_to_vmem [thread:$0]  %s1, 8064, %s30, [#allocation6], 128, 128, 8
    $region9: #{_forward_impl.1} parent=1 // pred_fallthru
      _
    // Predicated region
    $region10: #{_forward_impl.1} parent=1 // pred_check
      _
    $region11: #{_forward_impl.1} parent=1 // pred_check_branch
      %37 = sbr.rel (0) target = $region13
    $region12: #{_forward_impl.1} parent=1 // pred_region
      %s39 = ssub.s32 16384, 16384
      %40 = vsyncadd [#allocation6], %s39
      %s41 = sshll.u32 [#allocation7], 4
      %s42 = int_to_ptr.vmem [resolvable:$true] %s41
      %47 = dma.hbm_to_vmem [thread:$0]  %s2, 16384, %s42, [#allocation6], 128, 128, 8
    $region13: #{_forward_impl.1} parent=1 // pred_fallthru
      _
    // Predicated region
    $region14: #{_forward_impl.1} parent=1 // pred_check
      _
    $region15: #{_forward_impl.1} parent=1 // pred_check_branch
      %49 = sbr.rel (0) target = $region17
    $region16: #{_forward_impl.1} parent=1 // pred_region
      %s51 = ssub.s32 2048, 2048
      %52 = vsyncadd [#allocation9], %s51
      %s53 = sshll.u32 [#allocation8], 4
      %s54 = int_to_ptr.vmem [resolvable:$true] %s53
      %59 = dma.hbm_to_vmem [thread:$0]  %s3, 2048, %s54, [#allocation9], 64, 64, 4
    $region17: #{_forward_impl.1} parent=1 // pred_fallthru
      _
    // Predicated region
    $region18: #{_forward_impl.1} parent=1 // pred_check
      _
    $region19: #{_forward_impl.1} parent=1 // pred_check_branch
      %61 = sbr.rel (0) target = $region21
    $region20: #{_forward_impl.1} parent=1 // pred_region
      %s63 = ssub.s32 256, 256
      %64 = vsyncadd [#allocation9], %s63
      %s66 = sshll.u32 [#allocation10], 4
      %s67 = int_to_ptr.vmem [resolvable:$true] %s66
      %69 = dma.hbm_to_vmem [thread:$0]  %s4, 256, %s67, [#allocation9]
    $region21: #{_forward_impl.1} parent=1 // pred_fallthru
      _
    // Predicated region
    $region22: #{_forward_impl.1} parent=1 // pred_check
      _
    $region23: #{_forward_impl.1} parent=1 // pred_check_branch
      %71 = sbr.rel (0) target = $region25
    $region24: #{_forward_impl.1} parent=1 // pred_region
      %72 = dma.done [#allocation3], 128
    $region25: #{_forward_impl.1} parent=1 // pred_fallthru
      _
    // Predicated region
    $region26: #{_forward_impl.1} parent=1 // pred_check
      _
    $region27: #{_forward_impl.1} parent=1 // pred_check_branch
      %74 = sbr.rel (0) target = $region29
    $region28: #{_forward_impl.1} parent=1 // pred_region
      %75 = dma.done [#allocation6], 8064
    $region29: #{_forward_impl.1} parent=1 // pred_fallthru
      _
    // Predicated region
    $region30: #{_forward_impl.1} parent=1 // pred_check
      _
    $region31: #{_forward_impl.1} parent=1 // pred_check_branch
      %77 = sbr.rel (0) target = $region33
    $region32: #{_forward_impl.1} parent=1 // pred_region
      %78 = dma.done [#allocation6], 16384
    $region33: #{_forward_impl.1} parent=1 // pred_fallthru
      _
    // Predicated region
    $region34: #{_forward_impl.1} parent=1 // pred_check
      _
    $region35: #{_forward_impl.1} parent=1 // pred_check_branch
      %80 = sbr.rel (0) target = $region37
    $region36: #{_forward_impl.1} parent=1 // pred_region
      %81 = dma.done [#allocation9], 2048
    $region37: #{_forward_impl.1} parent=1 // pred_fallthru
      _
    // Predicated region
    $region38: #{_forward_impl.1} parent=1 // pred_check
      _
    $region39: #{_forward_impl.1} parent=1 // pred_check_branch
      %83 = sbr.rel (0) target = $region41
    $region40: #{_forward_impl.1} parent=1 // pred_region
      %84 = dma.done [#allocation9], 256
    $region41: #{_forward_impl.1} parent=1 // pred_fallthru
      _
    %v86 = vld [vmem:[#allocation10] sm:$0xff]
    %v87 = vld [vmem:[#allocation10 + $0x8] sm:$0xff]
    %v88 = vld [vmem:[#allocation2] sm:$0xff]
    %v90 = vcombine.high %v88, %v88
    %v92 = vunpack.c.l.s4 1983009808
    %v93 = vunpack.c.0.s8 %v92
    %v94 = vlaneseq
    %v95 = vshrl.u32 %v94, 7
    %v96 = vsub.s32 %v93, %v95
    %v97 = vrot.slane %v88, %v96
    %v99 = vunpack.c.l.s4 1983009808
    %v100 = vunpack.c.0.s8 %v99
    %v101 = vlaneseq
    %v102 = vshrl.u32 %v101, 7
    %v103 = vsub.s32 %v100, %v102
    %v104 = vrot.slane %v90, %v103
    %v105 = vcombine.high %v97, %v97
    %v106 = vcombine.high %v104, %v104
    %v111 = vpack.c.bf16 %v97, %v97
    %v112 = vpack.c.bf16 %v105, %v105
    %v113 = vpack.c.bf16 %v104, %v104
    %v114 = vpack.c.bf16 %v106, %v106
    %v115 = vld [vmem:[#allocation5] sm:$0xff]
    %v116 = vld [vmem:[#allocation5 + $0x8] sm:$0xff]
    %v117 = vld [vmem:[#allocation5 + $0x10] sm:$0xff]
    %v118 = vld [vmem:[#allocation5 + $0x18] sm:$0xff]
    %v119 = vld [vmem:[#allocation5 + $0x20] sm:$0xff]
    %v120 = vld [vmem:[#allocation5 + $0x28] sm:$0xff]
    %v121 = vld [vmem:[#allocation5 + $0x30] sm:$0xff]
    %v122 = vld [vmem:[#allocation5 + $0x38] sm:$0xff]
    %v123 = vld [vmem:[#allocation5 + $0x40] sm:$0xff]
    %v124 = vld [vmem:[#allocation5 + $0x48] sm:$0xff]
    %v125 = vld [vmem:[#allocation5 + $0x50] sm:$0xff]
    %v126 = vld [vmem:[#allocation5 + $0x58] sm:$0xff]
    %v127 = vld [vmem:[#allocation5 + $0x60] sm:$0xff]
    %v128 = vld [vmem:[#allocation5 + $0x68] sm:$0xff]
    %v129 = vld [vmem:[#allocation5 + $0x70] sm:$0xff]
    %v130 = vld [vmem:[#allocation5 + $0x78] sm:$0xff]
    %v131 = vld [vmem:[#allocation5 + $0x80] sm:$0xff]
    %v132 = vld [vmem:[#allocation5 + $0x88] sm:$0xff]
    %v133 = vld [vmem:[#allocation5 + $0x90] sm:$0xff]
    %v134 = vld [vmem:[#allocation5 + $0x98] sm:$0xff]
    %v135 = vld [vmem:[#allocation5 + $0xa0] sm:$0xff]
    %v136 = vld [vmem:[#allocation5 + $0xa8] sm:$0xff]
    %v137 = vld [vmem:[#allocation5 + $0xb0] sm:$0xff]
    %v138 = vld [vmem:[#allocation5 + $0xb8] sm:$0xff]
    %v139 = vld [vmem:[#allocation5 + $0xc0] sm:$0xff]
    %v140 = vld [vmem:[#allocation5 + $0xc8] sm:$0xff]
    %v141 = vld [vmem:[#allocation5 + $0xd0] sm:$0xff]
    %v142 = vld [vmem:[#allocation5 + $0xd8] sm:$0xff]
    %v143 = vld [vmem:[#allocation5 + $0xe0] sm:$0xff]
    %v144 = vld [vmem:[#allocation5 + $0xe8] sm:$0xff]
    %v145 = vld [vmem:[#allocation5 + $0xf0] sm:$0xff]
    %v146 = vld [vmem:[#allocation5 + $0xf8] sm:$0xff]
    %v147 = vld [vmem:[#allocation5 + $0x100] sm:$0xff]
    %v148 = vld [vmem:[#allocation5 + $0x108] sm:$0xff]
    %v149 = vld [vmem:[#allocation5 + $0x110] sm:$0xff]
    %v150 = vld [vmem:[#allocation5 + $0x118] sm:$0xff]
    %v151 = vld [vmem:[#allocation5 + $0x120] sm:$0xff]
    %v152 = vld [vmem:[#allocation5 + $0x128] sm:$0xff]
    %v153 = vld [vmem:[#allocation5 + $0x130] sm:$0xff]
    %v154 = vld [vmem:[#allocation5 + $0x138] sm:$0xff]
    %v155 = vld [vmem:[#allocation5 + $0x140] sm:$0xff]
    %v156 = vld [vmem:[#allocation5 + $0x148] sm:$0xff]
    %v157 = vld [vmem:[#allocation5 + $0x150] sm:$0xff]
    %v158 = vld [vmem:[#allocation5 + $0x158] sm:$0xff]
    %v159 = vld [vmem:[#allocation5 + $0x160] sm:$0xff]
    %v160 = vld [vmem:[#allocation5 + $0x168] sm:$0xff]
    %v161 = vld [vmem:[#allocation5 + $0x170] sm:$0xff]
    %v162 = vld [vmem:[#allocation5 + $0x178] sm:$0xff]
    %v163 = vld [vmem:[#allocation5 + $0x180] sm:$0xff]
    %v164 = vld [vmem:[#allocation5 + $0x188] sm:$0xff]
    %v165 = vld [vmem:[#allocation5 + $0x190] sm:$0xff]
    %v166 = vld [vmem:[#allocation5 + $0x198] sm:$0xff]
    %v167 = vld [vmem:[#allocation5 + $0x1a0] sm:$0xff]
    %v168 = vld [vmem:[#allocation5 + $0x1a8] sm:$0xff]
    %v169 = vld [vmem:[#allocation5 + $0x1b0] sm:$0xff]
    %v170 = vld [vmem:[#allocation5 + $0x1b8] sm:$0xff]
    %v171 = vld [vmem:[#allocation5 + $0x1c0] sm:$0xff]
    %v172 = vld [vmem:[#allocation5 + $0x1c8] sm:$0xff]
    %v173 = vld [vmem:[#allocation5 + $0x1d0] sm:$0xff]
    %v174 = vld [vmem:[#allocation5 + $0x1d8] sm:$0xff]
    %v175 = vld [vmem:[#allocation5 + $0x1e0] sm:$0xff]
    %v176 = vld [vmem:[#allocation5 + $0x1e8] sm:$0xff]
    %v177 = vld [vmem:[#allocation5 + $0x1f0] sm:$0x33]
    %v241 = vunpack.c.l.b16 %v115
    %v242 = vunpack.c.h.b16 %v115
    %v243 = vunpack.c.l.b16 %v116
    %v244 = vunpack.c.h.b16 %v116
    %v245 = vunpack.c.l.b16 %v117
    %v246 = vunpack.c.h.b16 %v117
    %v247 = vunpack.c.l.b16 %v118
    %v248 = vunpack.c.h.b16 %v118
    %v249 = vunpack.c.l.b16 %v119
    %v250 = vunpack.c.h.b16 %v119
    %v251 = vunpack.c.l.b16 %v120
    %v252 = vunpack.c.h.b16 %v120
    %v253 = vunpack.c.l.b16 %v121
    %v254 = vunpack.c.h.b16 %v121
    %v255 = vunpack.c.l.b16 %v122
    %v256 = vunpack.c.h.b16 %v122
    %v257 = vunpack.c.l.b16 %v123
    %v258 = vunpack.c.h.b16 %v123
    %v259 = vunpack.c.l.b16 %v124
    %v260 = vunpack.c.h.b16 %v124
    %v261 = vunpack.c.l.b16 %v125
    %v262 = vunpack.c.h.b16 %v125
    %v263 = vunpack.c.l.b16 %v126
    %v264 = vunpack.c.h.b16 %v126
    %v265 = vunpack.c.l.b16 %v127
    %v266 = vunpack.c.h.b16 %v127
    %v267 = vunpack.c.l.b16 %v128
    %v268 = vunpack.c.h.b16 %v128
    %v269 = vunpack.c.l.b16 %v129
    %v270 = vunpack.c.h.b16 %v129
    %v271 = vunpack.c.l.b16 %v130
    %v272 = vunpack.c.h.b16 %v130
    %v273 = vunpack.c.l.b16 %v131
    %v274 = vunpack.c.h.b16 %v131
    %v275 = vunpack.c.l.b16 %v132
    %v276 = vunpack.c.h.b16 %v132
    %v277 = vunpack.c.l.b16 %v133
    %v278 = vunpack.c.h.b16 %v133
    %v279 = vunpack.c.l.b16 %v134
    %v280 = vunpack.c.h.b16 %v134
    %v281 = vunpack.c.l.b16 %v135
    %v282 = vunpack.c.h.b16 %v135
    %v283 = vunpack.c.l.b16 %v136
    %v284 = vunpack.c.h.b16 %v136
    %v285 = vunpack.c.l.b16 %v137
    %v286 = vunpack.c.h.b16 %v137
    %v287 = vunpack.c.l.b16 %v138
    %v288 = vunpack.c.h.b16 %v138
    %v289 = vunpack.c.l.b16 %v139
    %v290 = vunpack.c.h.b16 %v139
    %v291 = vunpack.c.l.b16 %v140
    %v292 = vunpack.c.h.b16 %v140
    %v293 = vunpack.c.l.b16 %v141
    %v294 = vunpack.c.h.b16 %v141
    %v295 = vunpack.c.l.b16 %v142
    %v296 = vunpack.c.h.b16 %v142
    %v297 = vunpack.c.l.b16 %v143
    %v298 = vunpack.c.h.b16 %v143
    %v299 = vunpack.c.l.b16 %v144
    %v300 = vunpack.c.h.b16 %v144
    %v301 = vunpack.c.l.b16 %v145
    %v302 = vunpack.c.h.b16 %v145
    %v303 = vunpack.c.l.b16 %v146
    %v304 = vunpack.c.h.b16 %v146
    %v305 = vunpack.c.l.b16 %v147
    %v306 = vunpack.c.h.b16 %v147
    %v307 = vunpack.c.l.b16 %v148
    %v308 = vunpack.c.h.b16 %v148
    %v309 = vunpack.c.l.b16 %v149
    %v310 = vunpack.c.h.b16 %v149
    %v311 = vunpack.c.l.b16 %v150
    %v312 = vunpack.c.h.b16 %v150
    %v313 = vunpack.c.l.b16 %v151
    %v314 = vunpack.c.h.b16 %v151
    %v315 = vunpack.c.l.b16 %v152
    %v316 = vunpack.c.h.b16 %v152
    %v317 = vunpack.c.l.b16 %v153
    %v318 = vunpack.c.h.b16 %v153
    %v319 = vunpack.c.l.b16 %v154
    %v320 = vunpack.c.h.b16 %v154
    %v321 = vunpack.c.l.b16 %v155
    %v322 = vunpack.c.h.b16 %v155
    %v323 = vunpack.c.l.b16 %v156
    %v324 = vunpack.c.h.b16 %v156
    %v325 = vunpack.c.l.b16 %v157
    %v326 = vunpack.c.h.b16 %v157
    %v327 = vunpack.c.l.b16 %v158
    %v328 = vunpack.c.h.b16 %v158
    %v329 = vunpack.c.l.b16 %v159
    %v330 = vunpack.c.h.b16 %v159
    %v331 = vunpack.c.l.b16 %v160
    %v332 = vunpack.c.h.b16 %v160
    %v333 = vunpack.c.l.b16 %v161
    %v334 = vunpack.c.h.b16 %v161
    %v335 = vunpack.c.l.b16 %v162
    %v336 = vunpack.c.h.b16 %v162
    %v337 = vunpack.c.l.b16 %v163
    %v338 = vunpack.c.h.b16 %v163
    %v339 = vunpack.c.l.b16 %v164
    %v340 = vunpack.c.h.b16 %v164
    %v341 = vunpack.c.l.b16 %v165
    %v342 = vunpack.c.h.b16 %v165
    %v343 = vunpack.c.l.b16 %v166
    %v344 = vunpack.c.h.b16 %v166
    %v345 = vunpack.c.l.b16 %v167
    %v346 = vunpack.c.h.b16 %v167
    %v347 = vunpack.c.l.b16 %v168
    %v348 = vunpack.c.h.b16 %v168
    %v349 = vunpack.c.l.b16 %v169
    %v350 = vunpack.c.h.b16 %v169
    %v351 = vunpack.c.l.b16 %v170
    %v352 = vunpack.c.h.b16 %v170
    %v353 = vunpack.c.l.b16 %v171
    %v354 = vunpack.c.h.b16 %v171
    %v355 = vunpack.c.l.b16 %v172
    %v356 = vunpack.c.h.b16 %v172
    %v357 = vunpack.c.l.b16 %v173
    %v358 = vunpack.c.h.b16 %v173
    %v359 = vunpack.c.l.b16 %v174
    %v360 = vunpack.c.h.b16 %v174
    %v361 = vunpack.c.l.b16 %v175
    %v362 = vunpack.c.h.b16 %v175
    %v363 = vunpack.c.l.b16 %v176
    %v364 = vunpack.c.h.b16 %v176
    %v365 = vunpack.c.l.b16 %v177
    %v366 = vunpack.c.h.b16 %v177
    %v367 = vpack.c.b16 %v243, %v241
    %v368 = vpack.c.b16 %v244, %v242
    %v369 = vpack.c.b16 %v247, %v245
    %v370 = vpack.c.b16 %v248, %v246
    %v371 = vpack.c.b16 %v251, %v249
    %v372 = vpack.c.b16 %v252, %v250
    %v373 = vpack.c.b16 %v255, %v253
    %v374 = vpack.c.b16 %v256, %v254
    %v375 = vpack.c.b16 %v259, %v257
    %v376 = vpack.c.b16 %v260, %v258
    %v377 = vpack.c.b16 %v263, %v261
    %v378 = vpack.c.b16 %v264, %v262
    %v379 = vpack.c.b16 %v267, %v265
    %v380 = vpack.c.b16 %v268, %v266
    %v381 = vpack.c.b16 %v271, %v269
    %v382 = vpack.c.b16 %v272, %v270
    %v383 = vpack.c.b16 %v275, %v273
    %v384 = vpack.c.b16 %v276, %v274
    %v385 = vpack.c.b16 %v279, %v277
    %v386 = vpack.c.b16 %v280, %v278
    %v387 = vpack.c.b16 %v283, %v281
    %v388 = vpack.c.b16 %v284, %v282
    %v389 = vpack.c.b16 %v287, %v285
    %v390 = vpack.c.b16 %v288, %v286
    %v391 = vpack.c.b16 %v291, %v289
    %v392 = vpack.c.b16 %v292, %v290
    %v393 = vpack.c.b16 %v295, %v293
    %v394 = vpack.c.b16 %v296, %v294
    %v395 = vpack.c.b16 %v299, %v297
    %v396 = vpack.c.b16 %v300, %v298
    %v397 = vpack.c.b16 %v303, %v301
    %v398 = vpack.c.b16 %v304, %v302
    %v399 = vpack.c.b16 %v307, %v305
    %v400 = vpack.c.b16 %v308, %v306
    %v401 = vpack.c.b16 %v311, %v309
    %v402 = vpack.c.b16 %v312, %v310
    %v403 = vpack.c.b16 %v315, %v313
    %v404 = vpack.c.b16 %v316, %v314
    %v405 = vpack.c.b16 %v319, %v317
    %v406 = vpack.c.b16 %v320, %v318
    %v407 = vpack.c.b16 %v323, %v321
    %v408 = vpack.c.b16 %v324, %v322
    %v409 = vpack.c.b16 %v327, %v325
    %v410 = vpack.c.b16 %v328, %v326
    %v411 = vpack.c.b16 %v331, %v329
    %v412 = vpack.c.b16 %v332, %v330
    %v413 = vpack.c.b16 %v335, %v333
    %v414 = vpack.c.b16 %v336, %v334
    %v415 = vpack.c.b16 %v339, %v337
    %v416 = vpack.c.b16 %v340, %v338
    %v417 = vpack.c.b16 %v343, %v341
    %v418 = vpack.c.b16 %v344, %v342
    %v419 = vpack.c.b16 %v347, %v345
    %v420 = vpack.c.b16 %v348, %v346
    %v421 = vpack.c.b16 %v351, %v349
    %v422 = vpack.c.b16 %v352, %v350
    %v423 = vpack.c.b16 %v355, %v353
    %v424 = vpack.c.b16 %v356, %v354
    %v425 = vpack.c.b16 %v359, %v357
    %v426 = vpack.c.b16 %v360, %v358
    %v427 = vpack.c.b16 %v363, %v361
    %v428 = vpack.c.b16 %v364, %v362
    %v429 = vpack.c.b16 %v365, %v365
    %v430 = vpack.c.b16 %v366, %v366
    %vm493 = vcmask 949248
    %v495 = vsel %vm493, %v114, 0
    %vm497 = vcmask 1041408
    %v499 = vsel %vm497, %v429, 0
    %v502 = vsel %vm497, %v430, 0
    %504 = vmatprep.subr.bf16.mxu0 %v368
    %505 = vmatpush1.bf16.msra.mxu0 %v367
    %506 = vmatprep.subr.bf16.mxu0 %v370
    %507 = vmatpush1.bf16.msra.mxu0 %v369
    %508 = vmatprep.subr.bf16.mxu0 %v372
    %509 = vmatpush1.bf16.msra.mxu0 %v371
    %510 = vmatprep.subr.bf16.mxu0 %v374
    %511 = vmatpush1.bf16.msra.mxu0 %v373
    %512 = vmatprep.subr.bf16.mxu0 %v376
    %513 = vmatpush1.bf16.msra.mxu0 %v375
    %514 = vmatprep.subr.bf16.mxu0 %v378
    %515 = vmatpush1.bf16.msra.mxu0 %v377
    %516 = vmatprep.subr.bf16.mxu0 %v380
    %517 = vmatpush1.bf16.msra.mxu0 %v379
    %518 = vmatprep.subr.bf16.mxu0 %v382
    %519 = vmatpush1.bf16.msra.mxu0 %v381
    %520 = vmatprep.subr.bf16.mxu0 %v384
    %521 = vmatpush1.bf16.msra.mxu0 %v383
    %522 = vmatprep.subr.bf16.mxu0 %v386
    %523 = vmatpush1.bf16.msra.mxu0 %v385
    %524 = vmatprep.subr.bf16.mxu0 %v388
    %525 = vmatpush1.bf16.msra.mxu0 %v387
    %526 = vmatprep.subr.bf16.mxu0 %v390
    %527 = vmatpush1.bf16.msra.mxu0 %v389
    %528 = vmatprep.subr.bf16.mxu0 %v392
    %529 = vmatpush1.bf16.msra.mxu0 %v391
    %530 = vmatprep.subr.bf16.mxu0 %v394
    %531 = vmatpush1.bf16.msra.mxu0 %v393
    %532 = vmatprep.subr.bf16.mxu0 %v396
    %533 = vmatpush1.bf16.msra.mxu0 %v395
    %534 = vmatprep.subr.bf16.mxu0 %v398
    %535 = vmatpush1.bf16.msra.mxu0 %v397
    %536 = vmatprep.mubr.bf16.mxu0 %v112
    %537 = vmatmul.mubr.bf16.gmra.mrb[0].mxu0 %v111
    %v538 = vpop.f32.mrb[0].mxu0
    %v539 = vadd.f32 0.0, %v538
    %v540 = vpop.f32.mrb[0].mxu0
    %v541 = vadd.f32 0.0, %v540
    %v542 = vpop.f32.mrb[0].mxu0
    %v543 = vpop.f32.mrb[0].mxu0
    %544 = vdwg.mxu0
    %545 = vmatprep.subr.bf16.mxu0 %v400
    %546 = vmatpush1.bf16.msra.mxu0 %v399
    %547 = vmatprep.subr.bf16.mxu0 %v402
    %548 = vmatpush1.bf16.msra.mxu0 %v401
    %549 = vmatprep.subr.bf16.mxu0 %v404
    %550 = vmatpush1.bf16.msra.mxu0 %v403
    %551 = vmatprep.subr.bf16.mxu0 %v406
    %552 = vmatpush1.bf16.msra.mxu0 %v405
    %553 = vmatprep.subr.bf16.mxu0 %v408
    %554 = vmatpush1.bf16.msra.mxu0 %v407
    %555 = vmatprep.subr.bf16.mxu0 %v410
    %556 = vmatpush1.bf16.msra.mxu0 %v409
    %557 = vmatprep.subr.bf16.mxu0 %v412
    %558 = vmatpush1.bf16.msra.mxu0 %v411
    %559 = vmatprep.subr.bf16.mxu0 %v414
    %560 = vmatpush1.bf16.msra.mxu0 %v413
    %561 = vmatprep.subr.bf16.mxu0 %v416
    %562 = vmatpush1.bf16.msra.mxu0 %v415
    %563 = vmatprep.subr.bf16.mxu0 %v418
    %564 = vmatpush1.bf16.msra.mxu0 %v417
    %565 = vmatprep.subr.bf16.mxu0 %v420
    %566 = vmatpush1.bf16.msra.mxu0 %v419
    %567 = vmatprep.subr.bf16.mxu0 %v422
    %568 = vmatpush1.bf16.msra.mxu0 %v421
    %569 = vmatprep.subr.bf16.mxu0 %v424
    %570 = vmatpush1.bf16.msra.mxu0 %v423
    %571 = vmatprep.subr.bf16.mxu0 %v426
    %572 = vmatpush1.bf16.msra.mxu0 %v425
    %573 = vmatprep.subr.bf16.mxu0 %v428
    %574 = vmatpush1.bf16.msra.mxu0 %v427
    %575 = vmatprep.subr.bf16.mxu0 %v502
    %576 = vmatpush1.bf16.msra.mxu0 %v499
    %577 = vmatprep.mubr.bf16.mxu0 %v495
    %578 = vmatmul.mubr.bf16.gmra.mrb[0].mxu0 %v113
    %v579 = vpop.f32.mrb[0].mxu0
    %v580 = vadd.f32 %v539, %v579
    %v581 = vpop.f32.mrb[0].mxu0
    %v582 = vadd.f32 %v541, %v581
    %v583 = vpop.f32.mrb[0].mxu0
    %v584 = vpop.f32.mrb[0].mxu0
    %585 = vdwg.mxu0
    %v586 = vpack.c.bf16 %v86, %v86
    %v587 = vpack.c.bf16 %v87, %v87
    %v588 = vpack.c.bf16 %v580, %v580
    %v589 = vpack.c.bf16 %v582, %v582
    %v591 = vpack.i.b16 %v586, %v586
    %v593 = vlaneseq
    %v594 = vshrl.u32 %v593, 7
    %v595 = vsub.s32 0, %v594
    %v596 = vrot.slane %v591, %v595
    %v598 = vpack.i.b16 %v587, %v587
    %v600 = vlaneseq
    %v601 = vshrl.u32 %v600, 7
    %v602 = vsub.s32 0, %v601
    %v603 = vrot.slane %v598, %v602
    %v604 = vadd.bf16 %v588, %v596
    %v605 = vadd.bf16 %v589, %v603
    %v606 = vmax.bf16 %v604, 0
    %v607 = vmax.bf16 %v605, 0
    %v608 = vld [vmem:[#allocation7] sm:$0xff]
    %v609 = vld [vmem:[#allocation7 + $0x8] sm:$0xff]
    %v610 = vld [vmem:[#allocation7 + $0x10] sm:$0xff]
    %v611 = vld [vmem:[#allocation7 + $0x18] sm:$0xff]
    %v612 = vld [vmem:[#allocation7 + $0x20] sm:$0xff]
    %v613 = vld [vmem:[#allocation7 + $0x28] sm:$0xff]
    %v614 = vld [vmem:[#allocation7 + $0x30] sm:$0xff]
    %v615 = vld [vmem:[#allocation7 + $0x38] sm:$0xff]
    %v616 = vld [vmem:[#allocation7 + $0x40] sm:$0xff]
    %v617 = vld [vmem:[#allocation7 + $0x48] sm:$0xff]
    %v618 = vld [vmem:[#allocation7 + $0x50] sm:$0xff]
    %v619 = vld [vmem:[#allocation7 + $0x58] sm:$0xff]
    %v620 = vld [vmem:[#allocation7 + $0x60] sm:$0xff]
    %v621 = vld [vmem:[#allocation7 + $0x68] sm:$0xff]
    %v622 = vld [vmem:[#allocation7 + $0x70] sm:$0xff]
    %v623 = vld [vmem:[#allocation7 + $0x78] sm:$0xff]
    %v624 = vld [vmem:[#allocation7 + $0x80] sm:$0xff]
    %v625 = vld [vmem:[#allocation7 + $0x88] sm:$0xff]
    %v626 = vld [vmem:[#allocation7 + $0x90] sm:$0xff]
    %v627 = vld [vmem:[#allocation7 + $0x98] sm:$0xff]
    %v628 = vld [vmem:[#allocation7 + $0xa0] sm:$0xff]
    %v629 = vld [vmem:[#allocation7 + $0xa8] sm:$0xff]
    %v630 = vld [vmem:[#allocation7 + $0xb0] sm:$0xff]
    %v631 = vld [vmem:[#allocation7 + $0xb8] sm:$0xff]
    %v632 = vld [vmem:[#allocation7 + $0xc0] sm:$0xff]
    %v633 = vld [vmem:[#allocation7 + $0xc8] sm:$0xff]
    %v634 = vld [vmem:[#allocation7 + $0xd0] sm:$0xff]
    %v635 = vld [vmem:[#allocation7 + $0xd8] sm:$0xff]
    %v636 = vld [vmem:[#allocation7 + $0xe0] sm:$0xff]
    %v637 = vld [vmem:[#allocation7 + $0xe8] sm:$0xff]
    %v638 = vld [vmem:[#allocation7 + $0xf0] sm:$0xff]
    %v639 = vld [vmem:[#allocation7 + $0xf8] sm:$0xff]
    %v672 = vunpack.c.l.b16 %v608
    %v673 = vunpack.c.h.b16 %v608
    %v674 = vunpack.c.l.b16 %v609
    %v675 = vunpack.c.h.b16 %v609
    %v676 = vunpack.c.l.b16 %v610
    %v677 = vunpack.c.h.b16 %v610
    %v678 = vunpack.c.l.b16 %v611
    %v679 = vunpack.c.h.b16 %v611
    %v680 = vunpack.c.l.b16 %v612
    %v681 = vunpack.c.h.b16 %v612
    %v682 = vunpack.c.l.b16 %v613
    %v683 = vunpack.c.h.b16 %v613
    %v684 = vunpack.c.l.b16 %v614
    %v685 = vunpack.c.h.b16 %v614
    %v686 = vunpack.c.l.b16 %v615
    %v687 = vunpack.c.h.b16 %v615
    %v688 = vunpack.c.l.b16 %v616
    %v689 = vunpack.c.h.b16 %v616
    %v690 = vunpack.c.l.b16 %v617
    %v691 = vunpack.c.h.b16 %v617
    %v692 = vunpack.c.l.b16 %v618
    %v693 = vunpack.c.h.b16 %v618
    %v694 = vunpack.c.l.b16 %v619
    %v695 = vunpack.c.h.b16 %v619
    %v696 = vunpack.c.l.b16 %v620
    %v697 = vunpack.c.h.b16 %v620
    %v698 = vunpack.c.l.b16 %v621
    %v699 = vunpack.c.h.b16 %v621
    %v700 = vunpack.c.l.b16 %v622
    %v701 = vunpack.c.h.b16 %v622
    %v702 = vunpack.c.l.b16 %v623
    %v703 = vunpack.c.h.b16 %v623
    %v704 = vunpack.c.l.b16 %v624
    %v705 = vunpack.c.h.b16 %v624
    %v706 = vunpack.c.l.b16 %v625
    %v707 = vunpack.c.h.b16 %v625
    %v708 = vunpack.c.l.b16 %v626
    %v709 = vunpack.c.h.b16 %v626
    %v710 = vunpack.c.l.b16 %v627
    %v711 = vunpack.c.h.b16 %v627
    %v712 = vunpack.c.l.b16 %v628
    %v713 = vunpack.c.h.b16 %v628
    %v714 = vunpack.c.l.b16 %v629
    %v715 = vunpack.c.h.b16 %v629
    %v716 = vunpack.c.l.b16 %v630
    %v717 = vunpack.c.h.b16 %v630
    %v718 = vunpack.c.l.b16 %v631
    %v719 = vunpack.c.h.b16 %v631
    %v720 = vunpack.c.l.b16 %v632
    %v721 = vunpack.c.h.b16 %v632
    %v722 = vunpack.c.l.b16 %v633
    %v723 = vunpack.c.h.b16 %v633
    %v724 = vunpack.c.l.b16 %v634
    %v725 = vunpack.c.h.b16 %v634
    %v726 = vunpack.c.l.b16 %v635
    %v727 = vunpack.c.h.b16 %v635
    %v728 = vunpack.c.l.b16 %v636
    %v729 = vunpack.c.h.b16 %v636
    %v730 = vunpack.c.l.b16 %v637
    %v731 = vunpack.c.h.b16 %v637
    %v732 = vunpack.c.l.b16 %v638
    %v733 = vunpack.c.h.b16 %v638
    %v734 = vunpack.c.l.b16 %v639
    %v735 = vunpack.c.h.b16 %v639
    %v736 = vpack.c.b16 %v674, %v672
    %v737 = vpack.c.b16 %v675, %v673
    %v738 = vpack.c.b16 %v678, %v676
    %v739 = vpack.c.b16 %v679, %v677
    %v740 = vpack.c.b16 %v682, %v680
    %v741 = vpack.c.b16 %v683, %v681
    %v742 = vpack.c.b16 %v686, %v684
    %v743 = vpack.c.b16 %v687, %v685
    %v744 = vpack.c.b16 %v690, %v688
    %v745 = vpack.c.b16 %v691, %v689
    %v746 = vpack.c.b16 %v694, %v692
    %v747 = vpack.c.b16 %v695, %v693
    %v748 = vpack.c.b16 %v698, %v696
    %v749 = vpack.c.b16 %v699, %v697
    %v750 = vpack.c.b16 %v702, %v700
    %v751 = vpack.c.b16 %v703, %v701
    %v752 = vpack.c.b16 %v706, %v704
    %v753 = vpack.c.b16 %v707, %v705
    %v754 = vpack.c.b16 %v710, %v708
    %v755 = vpack.c.b16 %v711, %v709
    %v756 = vpack.c.b16 %v714, %v712
    %v757 = vpack.c.b16 %v715, %v713
    %v758 = vpack.c.b16 %v718, %v716
    %v759 = vpack.c.b16 %v719, %v717
    %v760 = vpack.c.b16 %v722, %v720
    %v761 = vpack.c.b16 %v723, %v721
    %v762 = vpack.c.b16 %v726, %v724
    %v763 = vpack.c.b16 %v727, %v725
    %v764 = vpack.c.b16 %v730, %v728
    %v765 = vpack.c.b16 %v731, %v729
    %v766 = vpack.c.b16 %v734, %v732
    %v767 = vpack.c.b16 %v735, %v733
    %800 = vmatprep.subr.bf16.mxu0 %v737
    %801 = vmatpush1.bf16.msra.mxu0 %v736
    %802 = vmatprep.subr.bf16.mxu0 %v739
    %803 = vmatpush1.bf16.msra.mxu0 %v738
    %804 = vmatprep.subr.bf16.mxu0 %v741
    %805 = vmatpush1.bf16.msra.mxu0 %v740
    %806 = vmatprep.subr.bf16.mxu0 %v743
    %807 = vmatpush1.bf16.msra.mxu0 %v742
    %808 = vmatprep.subr.bf16.mxu0 %v745
    %809 = vmatpush1.bf16.msra.mxu0 %v744
    %810 = vmatprep.subr.bf16.mxu0 %v747
    %811 = vmatpush1.bf16.msra.mxu0 %v746
    %812 = vmatprep.subr.bf16.mxu0 %v749
    %813 = vmatpush1.bf16.msra.mxu0 %v748
    %814 = vmatprep.subr.bf16.mxu0 %v751
    %815 = vmatpush1.bf16.msra.mxu0 %v750
    %816 = vmatprep.subr.bf16.mxu0 %v753
    %817 = vmatpush1.bf16.msra.mxu0 %v752
    %818 = vmatprep.subr.bf16.mxu0 %v755
    %819 = vmatpush1.bf16.msra.mxu0 %v754
    %820 = vmatprep.subr.bf16.mxu0 %v757
    %821 = vmatpush1.bf16.msra.mxu0 %v756
    %822 = vmatprep.subr.bf16.mxu0 %v759
    %823 = vmatpush1.bf16.msra.mxu0 %v758
    %824 = vmatprep.subr.bf16.mxu0 %v761
    %825 = vmatpush1.bf16.msra.mxu0 %v760
    %826 = vmatprep.subr.bf16.mxu0 %v763
    %827 = vmatpush1.bf16.msra.mxu0 %v762
    %828 = vmatprep.subr.bf16.mxu0 %v765
    %829 = vmatpush1.bf16.msra.mxu0 %v764
    %830 = vmatprep.subr.bf16.mxu0 %v767
    %831 = vmatpush1.bf16.msra.mxu0 %v766
    %832 = vmatprep.mubr.bf16.mxu0 %v607
    %833 = vmatmul.mubr.bf16.gmra.mrb[0].mxu0 %v606
    %v834 = vpop.f32.mrb[0].mxu0
    %v835 = vadd.f32 0.0, %v834
    %v836 = vpop.f32.mrb[0].mxu0
    %v837 = vadd.f32 0.0, %v836
    %v838 = vpop.f32.mrb[0].mxu0
    %v839 = vpop.f32.mrb[0].mxu0
    %840 = vdwg.mxu0
    %v841 = vpack.c.bf16 %v835, %v835
    %v842 = vpack.c.bf16 %v837, %v837
    %v843 = vshrl.u32 %v586, 16
    %v844 = vpack.i.b16 %v843, %v843
    %v846 = vlaneseq
    %v847 = vshrl.u32 %v846, 7
    %v848 = vsub.s32 0, %v847
    %v849 = vrot.slane %v844, %v848
    %v850 = vshrl.u32 %v587, 16
    %v851 = vpack.i.b16 %v850, %v850
    %v853 = vlaneseq
    %v854 = vshrl.u32 %v853, 7
    %v855 = vsub.s32 0, %v854
    %v856 = vrot.slane %v851, %v855
    %v857 = vadd.bf16 %v841, %v849
    %v858 = vadd.bf16 %v842, %v856
    %v859 = vmax.bf16 %v857, 0
    %v860 = vmax.bf16 %v858, 0
    %s861 = scalar_lea.vmem [#allocation7], 256
    %v862 = vld [vmem:[%s861] sm:$0xff]
    %v863 = vld [vmem:[%s861 + $0x8] sm:$0xff]
    %v864 = vld [vmem:[%s861 + $0x10] sm:$0xff]
    %v865 = vld [vmem:[%s861 + $0x18] sm:$0xff]
    %v866 = vld [vmem:[%s861 + $0x20] sm:$0xff]
    %v867 = vld [vmem:[%s861 + $0x28] sm:$0xff]
    %v868 = vld [vmem:[%s861 + $0x30] sm:$0xff]
    %v869 = vld [vmem:[%s861 + $0x38] sm:$0xff]
    %v870 = vld [vmem:[%s861 + $0x40] sm:$0xff]
    %v871 = vld [vmem:[%s861 + $0x48] sm:$0xff]
    %v872 = vld [vmem:[%s861 + $0x50] sm:$0xff]
    %v873 = vld [vmem:[%s861 + $0x58] sm:$0xff]
    %v874 = vld [vmem:[%s861 + $0x60] sm:$0xff]
    %v875 = vld [vmem:[%s861 + $0x68] sm:$0xff]
    %v876 = vld [vmem:[%s861 + $0x70] sm:$0xff]
    %v877 = vld [vmem:[%s861 + $0x78] sm:$0xff]
    %v878 = vld [vmem:[%s861 + $0x80] sm:$0xff]
    %v879 = vld [vmem:[%s861 + $0x88] sm:$0xff]
    %v880 = vld [vmem:[%s861 + $0x90] sm:$0xff]
    %v881 = vld [vmem:[%s861 + $0x98] sm:$0xff]
    %v882 = vld [vmem:[%s861 + $0xa0] sm:$0xff]
    %v883 = vld [vmem:[%s861 + $0xa8] sm:$0xff]
    %v884 = vld [vmem:[%s861 + $0xb0] sm:$0xff]
    %v885 = vld [vmem:[%s861 + $0xb8] sm:$0xff]
    %v886 = vld [vmem:[%s861 + $0xc0] sm:$0xff]
    %v887 = vld [vmem:[%s861 + $0xc8] sm:$0xff]
    %v888 = vld [vmem:[%s861 + $0xd0] sm:$0xff]
    %v889 = vld [vmem:[%s861 + $0xd8] sm:$0xff]
    %v890 = vld [vmem:[%s861 + $0xe0] sm:$0xff]
    %v891 = vld [vmem:[%s861 + $0xe8] sm:$0xff]
    %v892 = vld [vmem:[%s861 + $0xf0] sm:$0xff]
    %v893 = vld [vmem:[%s861 + $0xf8] sm:$0xff]
    %v926 = vunpack.c.l.b16 %v862
    %v927 = vunpack.c.h.b16 %v862
    %v928 = vunpack.c.l.b16 %v863
    %v929 = vunpack.c.h.b16 %v863
    %v930 = vunpack.c.l.b16 %v864
    %v931 = vunpack.c.h.b16 %v864
    %v932 = vunpack.c.l.b16 %v865
    %v933 = vunpack.c.h.b16 %v865
    %v934 = vunpack.c.l.b16 %v866
    %v935 = vunpack.c.h.b16 %v866
    %v936 = vunpack.c.l.b16 %v867
    %v937 = vunpack.c.h.b16 %v867
    %v938 = vunpack.c.l.b16 %v868
    %v939 = vunpack.c.h.b16 %v868
    %v940 = vunpack.c.l.b16 %v869
    %v941 = vunpack.c.h.b16 %v869
    %v942 = vunpack.c.l.b16 %v870
    %v943 = vunpack.c.h.b16 %v870
    %v944 = vunpack.c.l.b16 %v871
    %v945 = vunpack.c.h.b16 %v871
    %v946 = vunpack.c.l.b16 %v872
    %v947 = vunpack.c.h.b16 %v872
    %v948 = vunpack.c.l.b16 %v873
    %v949 = vunpack.c.h.b16 %v873
    %v950 = vunpack.c.l.b16 %v874
    %v951 = vunpack.c.h.b16 %v874
    %v952 = vunpack.c.l.b16 %v875
    %v953 = vunpack.c.h.b16 %v875
    %v954 = vunpack.c.l.b16 %v876
    %v955 = vunpack.c.h.b16 %v876
    %v956 = vunpack.c.l.b16 %v877
    %v957 = vunpack.c.h.b16 %v877
    %v958 = vunpack.c.l.b16 %v878
    %v959 = vunpack.c.h.b16 %v878
    %v960 = vunpack.c.l.b16 %v879
    %v961 = vunpack.c.h.b16 %v879
    %v962 = vunpack.c.l.b16 %v880
    %v963 = vunpack.c.h.b16 %v880
    %v964 = vunpack.c.l.b16 %v881
    %v965 = vunpack.c.h.b16 %v881
    %v966 = vunpack.c.l.b16 %v882
    %v967 = vunpack.c.h.b16 %v882
    %v968 = vunpack.c.l.b16 %v883
    %v969 = vunpack.c.h.b16 %v883
    %v970 = vunpack.c.l.b16 %v884
    %v971 = vunpack.c.h.b16 %v884
    %v972 = vunpack.c.l.b16 %v885
    %v973 = vunpack.c.h.b16 %v885
    %v974 = vunpack.c.l.b16 %v886
    %v975 = vunpack.c.h.b16 %v886
    %v976 = vunpack.c.l.b16 %v887
    %v977 = vunpack.c.h.b16 %v887
    %v978 = vunpack.c.l.b16 %v888
    %v979 = vunpack.c.h.b16 %v888
    %v980 = vunpack.c.l.b16 %v889
    %v981 = vunpack.c.h.b16 %v889
    %v982 = vunpack.c.l.b16 %v890
    %v983 = vunpack.c.h.b16 %v890
    %v984 = vunpack.c.l.b16 %v891
    %v985 = vunpack.c.h.b16 %v891
    %v986 = vunpack.c.l.b16 %v892
    %v987 = vunpack.c.h.b16 %v892
    %v988 = vunpack.c.l.b16 %v893
    %v989 = vunpack.c.h.b16 %v893
    %v990 = vpack.c.b16 %v928, %v926
    %v991 = vpack.c.b16 %v929, %v927
    %v992 = vpack.c.b16 %v932, %v930
    %v993 = vpack.c.b16 %v933, %v931
    %v994 = vpack.c.b16 %v936, %v934
    %v995 = vpack.c.b16 %v937, %v935
    %v996 = vpack.c.b16 %v940, %v938
    %v997 = vpack.c.b16 %v941, %v939
    %v998 = vpack.c.b16 %v944, %v942
    %v999 = vpack.c.b16 %v945, %v943
    %v1000 = vpack.c.b16 %v948, %v946
    %v1001 = vpack.c.b16 %v949, %v947
    %v1002 = vpack.c.b16 %v952, %v950
    %v1003 = vpack.c.b16 %v953, %v951
    %v1004 = vpack.c.b16 %v956, %v954
    %v1005 = vpack.c.b16 %v957, %v955
    %v1006 = vpack.c.b16 %v960, %v958
    %v1007 = vpack.c.b16 %v961, %v959
    %v1008 = vpack.c.b16 %v964, %v962
    %v1009 = vpack.c.b16 %v965, %v963
    %v1010 = vpack.c.b16 %v968, %v966
    %v1011 = vpack.c.b16 %v969, %v967
    %v1012 = vpack.c.b16 %v972, %v970
    %v1013 = vpack.c.b16 %v973, %v971
    %v1014 = vpack.c.b16 %v976, %v974
    %v1015 = vpack.c.b16 %v977, %v975
    %v1016 = vpack.c.b16 %v980, %v978
    %v1017 = vpack.c.b16 %v981, %v979
    %v1018 = vpack.c.b16 %v984, %v982
    %v1019 = vpack.c.b16 %v985, %v983
    %v1020 = vpack.c.b16 %v988, %v986
    %v1021 = vpack.c.b16 %v989, %v987
    %1054 = vmatprep.subr.bf16.mxu0 %v991
    %1055 = vmatpush1.bf16.msra.mxu0 %v990
    %1056 = vmatprep.subr.bf16.mxu0 %v993
    %1057 = vmatpush1.bf16.msra.mxu0 %v992
    %1058 = vmatprep.subr.bf16.mxu0 %v995
    %1059 = vmatpush1.bf16.msra.mxu0 %v994
    %1060 = vmatprep.subr.bf16.mxu0 %v997
    %1061 = vmatpush1.bf16.msra.mxu0 %v996
    %1062 = vmatprep.subr.bf16.mxu0 %v999
    %1063 = vmatpush1.bf16.msra.mxu0 %v998
    %1064 = vmatprep.subr.bf16.mxu0 %v1001
    %1065 = vmatpush1.bf16.msra.mxu0 %v1000
    %1066 = vmatprep.subr.bf16.mxu0 %v1003
    %1067 = vmatpush1.bf16.msra.mxu0 %v1002
    %1068 = vmatprep.subr.bf16.mxu0 %v1005
    %1069 = vmatpush1.bf16.msra.mxu0 %v1004
    %1070 = vmatprep.subr.bf16.mxu0 %v1007
    %1071 = vmatpush1.bf16.msra.mxu0 %v1006
    %1072 = vmatprep.subr.bf16.mxu0 %v1009
    %1073 = vmatpush1.bf16.msra.mxu0 %v1008
    %1074 = vmatprep.subr.bf16.mxu0 %v1011
    %1075 = vmatpush1.bf16.msra.mxu0 %v1010
    %1076 = vmatprep.subr.bf16.mxu0 %v1013
    %1077 = vmatpush1.bf16.msra.mxu0 %v1012
    %1078 = vmatprep.subr.bf16.mxu0 %v1015
    %1079 = vmatpush1.bf16.msra.mxu0 %v1014
    %1080 = vmatprep.subr.bf16.mxu0 %v1017
    %1081 = vmatpush1.bf16.msra.mxu0 %v1016
    %1082 = vmatprep.subr.bf16.mxu0 %v1019
    %1083 = vmatpush1.bf16.msra.mxu0 %v1018
    %1084 = vmatprep.subr.bf16.mxu0 %v1021
    %1085 = vmatpush1.bf16.msra.mxu0 %v1020
    %1086 = vmatprep.mubr.bf16.mxu0 %v860
    %1087 = vmatmul.mubr.bf16.gmra.mrb[0].mxu0 %v859
    %v1088 = vpop.f32.mrb[0].mxu0
    %v1089 = vadd.f32 0.0, %v1088
    %v1090 = vpop.f32.mrb[0].mxu0
    %v1091 = vadd.f32 0.0, %v1090
    %v1092 = vpop.f32.mrb[0].mxu0
    %v1093 = vpop.f32.mrb[0].mxu0
    %1094 = vdwg.mxu0
    %v1095 = vpack.c.bf16 %v1089, %v1089
    %v1096 = vpack.c.bf16 %v1091, %v1091
    %v1097 = vlaneseq
    %v1098 = vshrl.u32 %v1097, 7
    %v1099 = vsub.s32 1, %v1098
    %v1100 = vrot.slane %v591, %v1099
    %v1101 = vlaneseq
    %v1102 = vshrl.u32 %v1101, 7
    %v1103 = vsub.s32 1, %v1102
    %v1104 = vrot.slane %v598, %v1103
    %v1105 = vadd.bf16 %v1095, %v1100
    %v1106 = vadd.bf16 %v1096, %v1104
    %v1107 = vmax.bf16 %v1105, 0
    %v1108 = vmax.bf16 %v1106, 0
    %s1109 = scalar_lea.vmem [#allocation7], 512
    %v1110 = vld [vmem:[%s1109] sm:$0xff]
    %v1111 = vld [vmem:[%s1109 + $0x8] sm:$0xff]
    %v1112 = vld [vmem:[%s1109 + $0x10] sm:$0xff]
    %v1113 = vld [vmem:[%s1109 + $0x18] sm:$0xff]
    %v1114 = vld [vmem:[%s1109 + $0x20] sm:$0xff]
    %v1115 = vld [vmem:[%s1109 + $0x28] sm:$0xff]
    %v1116 = vld [vmem:[%s1109 + $0x30] sm:$0xff]
    %v1117 = vld [vmem:[%s1109 + $0x38] sm:$0xff]
    %v1118 = vld [vmem:[%s1109 + $0x40] sm:$0xff]
    %v1119 = vld [vmem:[%s1109 + $0x48] sm:$0xff]
    %v1120 = vld [vmem:[%s1109 + $0x50] sm:$0xff]
    %v1121 = vld [vmem:[%s1109 + $0x58] sm:$0xff]
    %v1122 = vld [vmem:[%s1109 + $0x60] sm:$0xff]
    %v1123 = vld [vmem:[%s1109 + $0x68] sm:$0xff]
    %v1124 = vld [vmem:[%s1109 + $0x70] sm:$0xff]
    %v1125 = vld [vmem:[%s1109 + $0x78] sm:$0xff]
    %v1126 = vld [vmem:[%s1109 + $0x80] sm:$0xff]
    %v1127 = vld [vmem:[%s1109 + $0x88] sm:$0xff]
    %v1128 = vld [vmem:[%s1109 + $0x90] sm:$0xff]
    %v1129 = vld [vmem:[%s1109 + $0x98] sm:$0xff]
    %v1130 = vld [vmem:[%s1109 + $0xa0] sm:$0xff]
    %v1131 = vld [vmem:[%s1109 + $0xa8] sm:$0xff]
    %v1132 = vld [vmem:[%s1109 + $0xb0] sm:$0xff]
    %v1133 = vld [vmem:[%s1109 + $0xb8] sm:$0xff]
    %v1134 = vld [vmem:[%s1109 + $0xc0] sm:$0xff]
    %v1135 = vld [vmem:[%s1109 + $0xc8] sm:$0xff]
    %v1136 = vld [vmem:[%s1109 + $0xd0] sm:$0xff]
    %v1137 = vld [vmem:[%s1109 + $0xd8] sm:$0xff]
    %v1138 = vld [vmem:[%s1109 + $0xe0] sm:$0xff]
    %v1139 = vld [vmem:[%s1109 + $0xe8] sm:$0xff]
    %v1140 = vld [vmem:[%s1109 + $0xf0] sm:$0xff]
    %v1141 = vld [vmem:[%s1109 + $0xf8] sm:$0xff]
    %v1174 = vunpack.c.l.b16 %v1110
    %v1175 = vunpack.c.h.b16 %v1110
    %v1176 = vunpack.c.l.b16 %v1111
    %v1177 = vunpack.c.h.b16 %v1111
    %v1178 = vunpack.c.l.b16 %v1112
    %v1179 = vunpack.c.h.b16 %v1112
    %v1180 = vunpack.c.l.b16 %v1113
    %v1181 = vunpack.c.h.b16 %v1113
    %v1182 = vunpack.c.l.b16 %v1114
    %v1183 = vunpack.c.h.b16 %v1114
    %v1184 = vunpack.c.l.b16 %v1115
    %v1185 = vunpack.c.h.b16 %v1115
    %v1186 = vunpack.c.l.b16 %v1116
    %v1187 = vunpack.c.h.b16 %v1116
    %v1188 = vunpack.c.l.b16 %v1117
    %v1189 = vunpack.c.h.b16 %v1117
    %v1190 = vunpack.c.l.b16 %v1118
    %v1191 = vunpack.c.h.b16 %v1118
    %v1192 = vunpack.c.l.b16 %v1119
    %v1193 = vunpack.c.h.b16 %v1119
    %v1194 = vunpack.c.l.b16 %v1120
    %v1195 = vunpack.c.h.b16 %v1120
    %v1196 = vunpack.c.l.b16 %v1121
    %v1197 = vunpack.c.h.b16 %v1121
    %v1198 = vunpack.c.l.b16 %v1122
    %v1199 = vunpack.c.h.b16 %v1122
    %v1200 = vunpack.c.l.b16 %v1123
    %v1201 = vunpack.c.h.b16 %v1123
    %v1202 = vunpack.c.l.b16 %v1124
    %v1203 = vunpack.c.h.b16 %v1124
    %v1204 = vunpack.c.l.b16 %v1125
    %v1205 = vunpack.c.h.b16 %v1125
    %v1206 = vunpack.c.l.b16 %v1126
    %v1207 = vunpack.c.h.b16 %v1126
    %v1208 = vunpack.c.l.b16 %v1127
    %v1209 = vunpack.c.h.b16 %v1127
    %v1210 = vunpack.c.l.b16 %v1128
    %v1211 = vunpack.c.h.b16 %v1128
    %v1212 = vunpack.c.l.b16 %v1129
    %v1213 = vunpack.c.h.b16 %v1129
    %v1214 = vunpack.c.l.b16 %v1130
    %v1215 = vunpack.c.h.b16 %v1130
    %v1216 = vunpack.c.l.b16 %v1131
    %v1217 = vunpack.c.h.b16 %v1131
    %v1218 = vunpack.c.l.b16 %v1132
    %v1219 = vunpack.c.h.b16 %v1132
    %v1220 = vunpack.c.l.b16 %v1133
    %v1221 = vunpack.c.h.b16 %v1133
    %v1222 = vunpack.c.l.b16 %v1134
    %v1223 = vunpack.c.h.b16 %v1134
    %v1224 = vunpack.c.l.b16 %v1135
    %v1225 = vunpack.c.h.b16 %v1135
    %v1226 = vunpack.c.l.b16 %v1136
    %v1227 = vunpack.c.h.b16 %v1136
    %v1228 = vunpack.c.l.b16 %v1137
    %v1229 = vunpack.c.h.b16 %v1137
    %v1230 = vunpack.c.l.b16 %v1138
    %v1231 = vunpack.c.h.b16 %v1138
    %v1232 = vunpack.c.l.b16 %v1139
    %v1233 = vunpack.c.h.b16 %v1139
    %v1234 = vunpack.c.l.b16 %v1140
    %v1235 = vunpack.c.h.b16 %v1140
    %v1236 = vunpack.c.l.b16 %v1141
    %v1237 = vunpack.c.h.b16 %v1141
    %v1238 = vpack.c.b16 %v1176, %v1174
    %v1239 = vpack.c.b16 %v1177, %v1175
    %v1240 = vpack.c.b16 %v1180, %v1178
    %v1241 = vpack.c.b16 %v1181, %v1179
    %v1242 = vpack.c.b16 %v1184, %v1182
    %v1243 = vpack.c.b16 %v1185, %v1183
    %v1244 = vpack.c.b16 %v1188, %v1186
    %v1245 = vpack.c.b16 %v1189, %v1187
    %v1246 = vpack.c.b16 %v1192, %v1190
    %v1247 = vpack.c.b16 %v1193, %v1191
    %v1248 = vpack.c.b16 %v1196, %v1194
    %v1249 = vpack.c.b16 %v1197, %v1195
    %v1250 = vpack.c.b16 %v1200, %v1198
    %v1251 = vpack.c.b16 %v1201, %v1199
    %v1252 = vpack.c.b16 %v1204, %v1202
    %v1253 = vpack.c.b16 %v1205, %v1203
    %v1254 = vpack.c.b16 %v1208, %v1206
    %v1255 = vpack.c.b16 %v1209, %v1207
    %v1256 = vpack.c.b16 %v1212, %v1210
    %v1257 = vpack.c.b16 %v1213, %v1211
    %v1258 = vpack.c.b16 %v1216, %v1214
    %v1259 = vpack.c.b16 %v1217, %v1215
    %v1260 = vpack.c.b16 %v1220, %v1218
    %v1261 = vpack.c.b16 %v1221, %v1219
    %v1262 = vpack.c.b16 %v1224, %v1222
    %v1263 = vpack.c.b16 %v1225, %v1223
    %v1264 = vpack.c.b16 %v1228, %v1226
    %v1265 = vpack.c.b16 %v1229, %v1227
    %v1266 = vpack.c.b16 %v1232, %v1230
    %v1267 = vpack.c.b16 %v1233, %v1231
    %v1268 = vpack.c.b16 %v1236, %v1234
    %v1269 = vpack.c.b16 %v1237, %v1235
    %1302 = vmatprep.subr.bf16.mxu0 %v1239
    %1303 = vmatpush1.bf16.msra.mxu0 %v1238
    %1304 = vmatprep.subr.bf16.mxu0 %v1241
    %1305 = vmatpush1.bf16.msra.mxu0 %v1240
    %1306 = vmatprep.subr.bf16.mxu0 %v1243
    %1307 = vmatpush1.bf16.msra.mxu0 %v1242
    %1308 = vmatprep.subr.bf16.mxu0 %v1245
    %1309 = vmatpush1.bf16.msra.mxu0 %v1244
    %1310 = vmatprep.subr.bf16.mxu0 %v1247
    %1311 = vmatpush1.bf16.msra.mxu0 %v1246
    %1312 = vmatprep.subr.bf16.mxu0 %v1249
    %1313 = vmatpush1.bf16.msra.mxu0 %v1248
    %1314 = vmatprep.subr.bf16.mxu0 %v1251
    %1315 = vmatpush1.bf16.msra.mxu0 %v1250
    %1316 = vmatprep.subr.bf16.mxu0 %v1253
    %1317 = vmatpush1.bf16.msra.mxu0 %v1252
    %1318 = vmatprep.subr.bf16.mxu0 %v1255
    %1319 = vmatpush1.bf16.msra.mxu0 %v1254
    %1320 = vmatprep.subr.bf16.mxu0 %v1257
    %1321 = vmatpush1.bf16.msra.mxu0 %v1256
    %1322 = vmatprep.subr.bf16.mxu0 %v1259
    %1323 = vmatpush1.bf16.msra.mxu0 %v1258
    %1324 = vmatprep.subr.bf16.mxu0 %v1261
    %1325 = vmatpush1.bf16.msra.mxu0 %v1260
    %1326 = vmatprep.subr.bf16.mxu0 %v1263
    %1327 = vmatpush1.bf16.msra.mxu0 %v1262
    %1328 = vmatprep.subr.bf16.mxu0 %v1265
    %1329 = vmatpush1.bf16.msra.mxu0 %v1264
    %1330 = vmatprep.subr.bf16.mxu0 %v1267
    %1331 = vmatpush1.bf16.msra.mxu0 %v1266
    %1332 = vmatprep.subr.bf16.mxu0 %v1269
    %1333 = vmatpush1.bf16.msra.mxu0 %v1268
    %1334 = vmatprep.mubr.bf16.mxu0 %v1108
    %1335 = vmatmul.mubr.bf16.gmra.mrb[0].mxu0 %v1107
    %v1336 = vpop.f32.mrb[0].mxu0
    %v1337 = vadd.f32 0.0, %v1336
    %v1338 = vpop.f32.mrb[0].mxu0
    %v1339 = vadd.f32 0.0, %v1338
    %v1340 = vpop.f32.mrb[0].mxu0
    %v1341 = vpop.f32.mrb[0].mxu0
    %1342 = vdwg.mxu0
    %v1343 = vpack.c.bf16 %v1337, %v1337
    %v1344 = vpack.c.bf16 %v1339, %v1339
    %v1345 = vlaneseq
    %v1346 = vshrl.u32 %v1345, 7
    %v1347 = vsub.s32 1, %v1346
    %v1348 = vrot.slane %v844, %v1347
    %v1349 = vlaneseq
    %v1350 = vshrl.u32 %v1349, 7
    %v1351 = vsub.s32 1, %v1350
    %v1352 = vrot.slane %v851, %v1351
    %v1353 = vadd.bf16 %v1343, %v1348
    %v1354 = vadd.bf16 %v1344, %v1352
    %v1355 = vmax.bf16 %v1353, 0
    %v1356 = vmax.bf16 %v1354, 0
    %s1357 = scalar_lea.vmem [#allocation7], 768
    %v1358 = vld [vmem:[%s1357] sm:$0xff]
    %v1359 = vld [vmem:[%s1357 + $0x8] sm:$0xff]
    %v1360 = vld [vmem:[%s1357 + $0x10] sm:$0xff]
    %v1361 = vld [vmem:[%s1357 + $0x18] sm:$0xff]
    %v1362 = vld [vmem:[%s1357 + $0x20] sm:$0xff]
    %v1363 = vld [vmem:[%s1357 + $0x28] sm:$0xff]
    %v1364 = vld [vmem:[%s1357 + $0x30] sm:$0xff]
    %v1365 = vld [vmem:[%s1357 + $0x38] sm:$0xff]
    %v1366 = vld [vmem:[%s1357 + $0x40] sm:$0xff]
    %v1367 = vld [vmem:[%s1357 + $0x48] sm:$0xff]
    %v1368 = vld [vmem:[%s1357 + $0x50] sm:$0xff]
    %v1369 = vld [vmem:[%s1357 + $0x58] sm:$0xff]
    %v1370 = vld [vmem:[%s1357 + $0x60] sm:$0xff]
    %v1371 = vld [vmem:[%s1357 + $0x68] sm:$0xff]
    %v1372 = vld [vmem:[%s1357 + $0x70] sm:$0xff]
    %v1373 = vld [vmem:[%s1357 + $0x78] sm:$0xff]
    %v1374 = vld [vmem:[%s1357 + $0x80] sm:$0xff]
    %v1375 = vld [vmem:[%s1357 + $0x88] sm:$0xff]
    %v1376 = vld [vmem:[%s1357 + $0x90] sm:$0xff]
    %v1377 = vld [vmem:[%s1357 + $0x98] sm:$0xff]
    %v1378 = vld [vmem:[%s1357 + $0xa0] sm:$0xff]
    %v1379 = vld [vmem:[%s1357 + $0xa8] sm:$0xff]
    %v1380 = vld [vmem:[%s1357 + $0xb0] sm:$0xff]
    %v1381 = vld [vmem:[%s1357 + $0xb8] sm:$0xff]
    %v1382 = vld [vmem:[%s1357 + $0xc0] sm:$0xff]
    %v1383 = vld [vmem:[%s1357 + $0xc8] sm:$0xff]
    %v1384 = vld [vmem:[%s1357 + $0xd0] sm:$0xff]
    %v1385 = vld [vmem:[%s1357 + $0xd8] sm:$0xff]
    %v1386 = vld [vmem:[%s1357 + $0xe0] sm:$0xff]
    %v1387 = vld [vmem:[%s1357 + $0xe8] sm:$0xff]
    %v1388 = vld [vmem:[%s1357 + $0xf0] sm:$0xff]
    %v1389 = vld [vmem:[%s1357 + $0xf8] sm:$0xff]
    %v1422 = vunpack.c.l.b16 %v1358
    %v1423 = vunpack.c.h.b16 %v1358
    %v1424 = vunpack.c.l.b16 %v1359
    %v1425 = vunpack.c.h.b16 %v1359
    %v1426 = vunpack.c.l.b16 %v1360
    %v1427 = vunpack.c.h.b16 %v1360
    %v1428 = vunpack.c.l.b16 %v1361
    %v1429 = vunpack.c.h.b16 %v1361
    %v1430 = vunpack.c.l.b16 %v1362
    %v1431 = vunpack.c.h.b16 %v1362
    %v1432 = vunpack.c.l.b16 %v1363
    %v1433 = vunpack.c.h.b16 %v1363
    %v1434 = vunpack.c.l.b16 %v1364
    %v1435 = vunpack.c.h.b16 %v1364
    %v1436 = vunpack.c.l.b16 %v1365
    %v1437 = vunpack.c.h.b16 %v1365
    %v1438 = vunpack.c.l.b16 %v1366
    %v1439 = vunpack.c.h.b16 %v1366
    %v1440 = vunpack.c.l.b16 %v1367
    %v1441 = vunpack.c.h.b16 %v1367
    %v1442 = vunpack.c.l.b16 %v1368
    %v1443 = vunpack.c.h.b16 %v1368
    %v1444 = vunpack.c.l.b16 %v1369
    %v1445 = vunpack.c.h.b16 %v1369
    %v1446 = vunpack.c.l.b16 %v1370
    %v1447 = vunpack.c.h.b16 %v1370
    %v1448 = vunpack.c.l.b16 %v1371
    %v1449 = vunpack.c.h.b16 %v1371
    %v1450 = vunpack.c.l.b16 %v1372
    %v1451 = vunpack.c.h.b16 %v1372
    %v1452 = vunpack.c.l.b16 %v1373
    %v1453 = vunpack.c.h.b16 %v1373
    %v1454 = vunpack.c.l.b16 %v1374
    %v1455 = vunpack.c.h.b16 %v1374
    %v1456 = vunpack.c.l.b16 %v1375
    %v1457 = vunpack.c.h.b16 %v1375
    %v1458 = vunpack.c.l.b16 %v1376
    %v1459 = vunpack.c.h.b16 %v1376
    %v1460 = vunpack.c.l.b16 %v1377
    %v1461 = vunpack.c.h.b16 %v1377
    %v1462 = vunpack.c.l.b16 %v1378
    %v1463 = vunpack.c.h.b16 %v1378
    %v1464 = vunpack.c.l.b16 %v1379
    %v1465 = vunpack.c.h.b16 %v1379
    %v1466 = vunpack.c.l.b16 %v1380
    %v1467 = vunpack.c.h.b16 %v1380
    %v1468 = vunpack.c.l.b16 %v1381
    %v1469 = vunpack.c.h.b16 %v1381
    %v1470 = vunpack.c.l.b16 %v1382
    %v1471 = vunpack.c.h.b16 %v1382
    %v1472 = vunpack.c.l.b16 %v1383
    %v1473 = vunpack.c.h.b16 %v1383
    %v1474 = vunpack.c.l.b16 %v1384
    %v1475 = vunpack.c.h.b16 %v1384
    %v1476 = vunpack.c.l.b16 %v1385
    %v1477 = vunpack.c.h.b16 %v1385
    %v1478 = vunpack.c.l.b16 %v1386
    %v1479 = vunpack.c.h.b16 %v1386
    %v1480 = vunpack.c.l.b16 %v1387
    %v1481 = vunpack.c.h.b16 %v1387
    %v1482 = vunpack.c.l.b16 %v1388
    %v1483 = vunpack.c.h.b16 %v1388
    %v1484 = vunpack.c.l.b16 %v1389
    %v1485 = vunpack.c.h.b16 %v1389
    %v1486 = vpack.c.b16 %v1424, %v1422
    %v1487 = vpack.c.b16 %v1425, %v1423
    %v1488 = vpack.c.b16 %v1428, %v1426
    %v1489 = vpack.c.b16 %v1429, %v1427
    %v1490 = vpack.c.b16 %v1432, %v1430
    %v1491 = vpack.c.b16 %v1433, %v1431
    %v1492 = vpack.c.b16 %v1436, %v1434
    %v1493 = vpack.c.b16 %v1437, %v1435
    %v1494 = vpack.c.b16 %v1440, %v1438
    %v1495 = vpack.c.b16 %v1441, %v1439
    %v1496 = vpack.c.b16 %v1444, %v1442
    %v1497 = vpack.c.b16 %v1445, %v1443
    %v1498 = vpack.c.b16 %v1448, %v1446
    %v1499 = vpack.c.b16 %v1449, %v1447
    %v1500 = vpack.c.b16 %v1452, %v1450
    %v1501 = vpack.c.b16 %v1453, %v1451
    %v1502 = vpack.c.b16 %v1456, %v1454
    %v1503 = vpack.c.b16 %v1457, %v1455
    %v1504 = vpack.c.b16 %v1460, %v1458
    %v1505 = vpack.c.b16 %v1461, %v1459
    %v1506 = vpack.c.b16 %v1464, %v1462
    %v1507 = vpack.c.b16 %v1465, %v1463
    %v1508 = vpack.c.b16 %v1468, %v1466
    %v1509 = vpack.c.b16 %v1469, %v1467
    %v1510 = vpack.c.b16 %v1472, %v1470
    %v1511 = vpack.c.b16 %v1473, %v1471
    %v1512 = vpack.c.b16 %v1476, %v1474
    %v1513 = vpack.c.b16 %v1477, %v1475
    %v1514 = vpack.c.b16 %v1480, %v1478
    %v1515 = vpack.c.b16 %v1481, %v1479
    %v1516 = vpack.c.b16 %v1484, %v1482
    %v1517 = vpack.c.b16 %v1485, %v1483
    %1550 = vmatprep.subr.bf16.mxu0 %v1487
    %1551 = vmatpush1.bf16.msra.mxu0 %v1486
    %1552 = vmatprep.subr.bf16.mxu0 %v1489
    %1553 = vmatpush1.bf16.msra.mxu0 %v1488
    %1554 = vmatprep.subr.bf16.mxu0 %v1491
    %1555 = vmatpush1.bf16.msra.mxu0 %v1490
    %1556 = vmatprep.subr.bf16.mxu0 %v1493
    %1557 = vmatpush1.bf16.msra.mxu0 %v1492
    %1558 = vmatprep.subr.bf16.mxu0 %v1495
    %1559 = vmatpush1.bf16.msra.mxu0 %v1494
    %1560 = vmatprep.subr.bf16.mxu0 %v1497
    %1561 = vmatpush1.bf16.msra.mxu0 %v1496
    %1562 = vmatprep.subr.bf16.mxu0 %v1499
    %1563 = vmatpush1.bf16.msra.mxu0 %v1498
    %1564 = vmatprep.subr.bf16.mxu0 %v1501
    %1565 = vmatpush1.bf16.msra.mxu0 %v1500
    %1566 = vmatprep.subr.bf16.mxu0 %v1503
    %1567 = vmatpush1.bf16.msra.mxu0 %v1502
    %1568 = vmatprep.subr.bf16.mxu0 %v1505
    %1569 = vmatpush1.bf16.msra.mxu0 %v1504
    %1570 = vmatprep.subr.bf16.mxu0 %v1507
    %1571 = vmatpush1.bf16.msra.mxu0 %v1506
    %1572 = vmatprep.subr.bf16.mxu0 %v1509
    %1573 = vmatpush1.bf16.msra.mxu0 %v1508
    %1574 = vmatprep.subr.bf16.mxu0 %v1511
    %1575 = vmatpush1.bf16.msra.mxu0 %v1510
    %1576 = vmatprep.subr.bf16.mxu0 %v1513
    %1577 = vmatpush1.bf16.msra.mxu0 %v1512
    %1578 = vmatprep.subr.bf16.mxu0 %v1515
    %1579 = vmatpush1.bf16.msra.mxu0 %v1514
    %1580 = vmatprep.subr.bf16.mxu0 %v1517
    %1581 = vmatpush1.bf16.msra.mxu0 %v1516
    %1582 = vmatprep.mubr.bf16.mxu0 %v1356
    %1583 = vmatmul.mubr.bf16.gmra.mrb[0].mxu0 %v1355
    %v1584 = vpop.f32.mrb[0].mxu0
    %v1585 = vadd.f32 0.0, %v1584
    %v1586 = vpop.f32.mrb[0].mxu0
    %v1587 = vadd.f32 0.0, %v1586
    %v1588 = vpop.f32.mrb[0].mxu0
    %v1589 = vpop.f32.mrb[0].mxu0
    %1590 = vdwg.mxu0
    %v1591 = vpack.c.bf16 %v1585, %v1585
    %v1592 = vpack.c.bf16 %v1587, %v1587
    %v1593 = vlaneseq
    %v1594 = vshrl.u32 %v1593, 7
    %v1595 = vsub.s32 2, %v1594
    %v1596 = vrot.slane %v591, %v1595
    %v1597 = vlaneseq
    %v1598 = vshrl.u32 %v1597, 7
    %v1599 = vsub.s32 2, %v1598
    %v1600 = vrot.slane %v598, %v1599
    %v1601 = vadd.bf16 %v1591, %v1596
    %v1602 = vadd.bf16 %v1592, %v1600
    %v1603 = vmax.bf16 %v1601, 0
    %v1604 = vmax.bf16 %v1602, 0
    %v1605 = vld [vmem:[#allocation8] sm:$0xf]
    %v1606 = vld [vmem:[#allocation8 + $0x4] sm:$0xf]
    %v1607 = vld [vmem:[#allocation8 + $0x8] sm:$0xf]
    %v1608 = vld [vmem:[#allocation8 + $0xc] sm:$0xf]
    %v1609 = vld [vmem:[#allocation8 + $0x10] sm:$0xf]
    %v1610 = vld [vmem:[#allocation8 + $0x14] sm:$0xf]
    %v1611 = vld [vmem:[#allocation8 + $0x18] sm:$0xf]
    %v1612 = vld [vmem:[#allocation8 + $0x1c] sm:$0xf]
    %v1613 = vld [vmem:[#allocation8 + $0x20] sm:$0xf]
    %v1614 = vld [vmem:[#allocation8 + $0x24] sm:$0xf]
    %v1615 = vld [vmem:[#allocation8 + $0x28] sm:$0xf]
    %v1616 = vld [vmem:[#allocation8 + $0x2c] sm:$0xf]
    %v1617 = vld [vmem:[#allocation8 + $0x30] sm:$0xf]
    %v1618 = vld [vmem:[#allocation8 + $0x34] sm:$0xf]
    %v1619 = vld [vmem:[#allocation8 + $0x38] sm:$0xf]
    %v1620 = vld [vmem:[#allocation8 + $0x3c] sm:$0xf]
    %v1621 = vld [vmem:[#allocation8 + $0x40] sm:$0xf]
    %v1622 = vld [vmem:[#allocation8 + $0x44] sm:$0xf]
    %v1623 = vld [vmem:[#allocation8 + $0x48] sm:$0xf]
    %v1624 = vld [vmem:[#allocation8 + $0x4c] sm:$0xf]
    %v1625 = vld [vmem:[#allocation8 + $0x50] sm:$0xf]
    %v1626 = vld [vmem:[#allocation8 + $0x54] sm:$0xf]
    %v1627 = vld [vmem:[#allocation8 + $0x58] sm:$0xf]
    %v1628 = vld [vmem:[#allocation8 + $0x5c] sm:$0xf]
    %v1629 = vld [vmem:[#allocation8 + $0x60] sm:$0xf]
    %v1630 = vld [vmem:[#allocation8 + $0x64] sm:$0xf]
    %v1631 = vld [vmem:[#allocation8 + $0x68] sm:$0xf]
    %v1632 = vld [vmem:[#allocation8 + $0x6c] sm:$0xf]
    %v1633 = vld [vmem:[#allocation8 + $0x70] sm:$0xf]
    %v1634 = vld [vmem:[#allocation8 + $0x74] sm:$0xf]
    %v1635 = vld [vmem:[#allocation8 + $0x78] sm:$0xf]
    %v1636 = vld [vmem:[#allocation8 + $0x7c] sm:$0xf]
    %v1637 = vlaneseq
    %v1638 = vshrl.u32 %v1637, 7
    %v1639 = vsub.s32 5, %v1638
    %v1640 = vrot.slane %v86, %v1639
    %v1673 = vunpack.c.l.b16 %v1605
    %v1674 = vunpack.c.l.b16 %v1606
    %v1675 = vunpack.c.l.b16 %v1607
    %v1676 = vunpack.c.l.b16 %v1608
    %v1677 = vunpack.c.l.b16 %v1609
    %v1678 = vunpack.c.l.b16 %v1610
    %v1679 = vunpack.c.l.b16 %v1611
    %v1680 = vunpack.c.l.b16 %v1612
    %v1681 = vunpack.c.l.b16 %v1613
    %v1682 = vunpack.c.l.b16 %v1614
    %v1683 = vunpack.c.l.b16 %v1615
    %v1684 = vunpack.c.l.b16 %v1616
    %v1685 = vunpack.c.l.b16 %v1617
    %v1686 = vunpack.c.l.b16 %v1618
    %v1687 = vunpack.c.l.b16 %v1619
    %v1688 = vunpack.c.l.b16 %v1620
    %v1689 = vunpack.c.l.b16 %v1621
    %v1690 = vunpack.c.l.b16 %v1622
    %v1691 = vunpack.c.l.b16 %v1623
    %v1692 = vunpack.c.l.b16 %v1624
    %v1693 = vunpack.c.l.b16 %v1625
    %v1694 = vunpack.c.l.b16 %v1626
    %v1695 = vunpack.c.l.b16 %v1627
    %v1696 = vunpack.c.l.b16 %v1628
    %v1697 = vunpack.c.l.b16 %v1629
    %v1698 = vunpack.c.l.b16 %v1630
    %v1699 = vunpack.c.l.b16 %v1631
    %v1700 = vunpack.c.l.b16 %v1632
    %v1701 = vunpack.c.l.b16 %v1633
    %v1702 = vunpack.c.l.b16 %v1634
    %v1703 = vunpack.c.l.b16 %v1635
    %v1704 = vunpack.c.l.b16 %v1636
    %v1705 = vpack.c.b16 %v1674, %v1673
    %v1706 = vpack.c.b16 %v1676, %v1675
    %v1707 = vpack.c.b16 %v1678, %v1677
    %v1708 = vpack.c.b16 %v1680, %v1679
    %v1709 = vpack.c.b16 %v1682, %v1681
    %v1710 = vpack.c.b16 %v1684, %v1683
    %v1711 = vpack.c.b16 %v1686, %v1685
    %v1712 = vpack.c.b16 %v1688, %v1687
    %v1713 = vpack.c.b16 %v1690, %v1689
    %v1714 = vpack.c.b16 %v1692, %v1691
    %v1715 = vpack.c.b16 %v1694, %v1693
    %v1716 = vpack.c.b16 %v1696, %v1695
    %v1717 = vpack.c.b16 %v1698, %v1697
    %v1718 = vpack.c.b16 %v1700, %v1699
    %v1719 = vpack.c.b16 %v1702, %v1701
    %v1720 = vpack.c.b16 %v1704, %v1703
    %1737 = vmatprep.subr.bf16.mxu0 0
    %1738 = vmatpush1.bf16.msra.mxu0 %v1705
    %1739 = vmatprep.subr.bf16.mxu0 0
    %1740 = vmatpush1.bf16.msra.mxu0 %v1706
    %1741 = vmatprep.subr.bf16.mxu0 0
    %1742 = vmatpush1.bf16.msra.mxu0 %v1707
    %1743 = vmatprep.subr.bf16.mxu0 0
    %1744 = vmatpush1.bf16.msra.mxu0 %v1708
    %1745 = vmatprep.subr.bf16.mxu0 0
    %1746 = vmatpush1.bf16.msra.mxu0 %v1709
    %1747 = vmatprep.subr.bf16.mxu0 0
    %1748 = vmatpush1.bf16.msra.mxu0 %v1710
    %1749 = vmatprep.subr.bf16.mxu0 0
    %1750 = vmatpush1.bf16.msra.mxu0 %v1711
    %1751 = vmatprep.subr.bf16.mxu0 0
    %1752 = vmatpush1.bf16.msra.mxu0 %v1712
    %1753 = vmatprep.subr.bf16.mxu0 0
    %1754 = vmatpush1.bf16.msra.mxu0 %v1713
    %1755 = vmatprep.subr.bf16.mxu0 0
    %1756 = vmatpush1.bf16.msra.mxu0 %v1714
    %1757 = vmatprep.subr.bf16.mxu0 0
    %1758 = vmatpush1.bf16.msra.mxu0 %v1715
    %1759 = vmatprep.subr.bf16.mxu0 0
    %1760 = vmatpush1.bf16.msra.mxu0 %v1716
    %1761 = vmatprep.subr.bf16.mxu0 0
    %1762 = vmatpush1.bf16.msra.mxu0 %v1717
    %1763 = vmatprep.subr.bf16.mxu0 0
    %1764 = vmatpush1.bf16.msra.mxu0 %v1718
    %1765 = vmatprep.subr.bf16.mxu0 0
    %1766 = vmatpush1.bf16.msra.mxu0 %v1719
    %1767 = vmatprep.subr.bf16.mxu0 0
    %1768 = vmatpush1.bf16.msra.mxu0 %v1720
    %1769 = vmatprep.mubr.bf16.mxu0 %v1604
    %1770 = vmatmul.mubr.bf16.gmra.mrb[0].mxu0 %v1603
    %v1771 = vpop.f32.mrb[0].mxu0
    %v1772 = vadd.f32 %v1640, %v1771
    %v1773 = vpop.f32.mrb[0].mxu0
    %v1774 = vpop.f32.mrb[0].mxu0
    %v1775 = vpop.f32.mrb[0].mxu0
    %1776 = vdwg.mxu0
    %1777 = vst [vmem:[#allocation11] sm:$0x3] %v1772
    // Predicated region
    $region42: #{_forward_impl.1} parent=1 // pred_check
      _
    $region43: #{_forward_impl.1} parent=1 // pred_check_branch
      %1779 = sbr.rel (0) target = $region45
    $region44: #{_forward_impl.1} parent=1 // pred_region
      %s1781 = ssub.s32 32, 32
      %1782 = vsyncadd [#allocation4], %s1781
      %s1784 = sshll.u32 [#allocation11], 4
      %s1785 = int_to_ptr.vmem [resolvable:$true] %s1784
      %1787 = dma.vmem_to_hbm [thread:$0]  %s1785, 32, %s5, [#allocation4]
    $region45: #{_forward_impl.1} parent=1 // pred_fallthru
      _
    // Predicated region
    $region46: #{_forward_impl.1} parent=1 // pred_check
      _
    $region47: #{_forward_impl.1} parent=1 // pred_check_branch
      %1789 = sbr.rel (0) target = $region49
    $region48: #{_forward_impl.1} parent=1 // pred_region
      %1790 = dma.done [#allocation4], 32
    $region49: #{_forward_impl.1} parent=1 // pred_fallthru
      _
    %1791 = vsyncpa [#allocation3], 1
    %1792 = vsyncpa [#allocation6], 1
    %1793 = vsyncpa [#allocation9], 1
    %1794 = vsyncpa [#allocation4], 1

</llo_original>
